<compile_context>
chip_gen: v6e
topology: v6e:2x2x1
jax: 0.10.0
libtpu: 0.0.40
codegen_flags: <defaults>
</compile_context>

<pallas_src>
import functools

import jax
import jax.numpy as jnp
from jax.experimental import pallas as pl
from jax.experimental.pallas import tpu as pltpu


def _vmem():
    return pl.BlockSpec(memory_space=pltpu.MemorySpace.VMEM)


# --------------------------------------------------------------------------
# Single fused kernel: conv+relu -> bi-LSTM -> (+res) uni-LSTM -> max -> dec
# --------------------------------------------------------------------------
def fused_forward_kernel(xcol_ref, convw_ref, w_ref, b_ref, o_ref, *, B, H, L):
    f32 = jnp.float32
    H2 = H // 2
    G = 4 * H                      # gate width (bi fwd+bwd combined == uni)
    T, N = B, L                    # LSTM "time" = torch batch axis, "batch" = L

    # ---- Conv1d + ReLU: ONE im2col matmul (T*N, F*E) @ (F*E, H).
    conv_b = b_ref[3:4, 0:H]                                        # (1, H)
    x_all = jnp.maximum(
        jnp.dot(xcol_ref[...], convw_ref[...], preferred_element_type=f32)
        + conv_b, 0.0)                                              # (T*N, H)
    # dropout: eval-mode identity

    # ---- Weight slabs (single stacked VMEM input; static row slices).
    wih_bi_f = w_ref[0 * H:1 * H, 0:G]   # x -> fwd gates (interleaved columns)
    wih_bi_b = w_ref[1 * H:2 * H, 0:G]   # x -> bwd gates (interleaved columns)
    whh_bi   = w_ref[2 * H:3 * H, 0:G]   # block-diag: [h_f | h_b] -> gates
    wih_uni  = w_ref[3 * H:4 * H, 0:G]
    whh_uni  = w_ref[4 * H:5 * H, 0:G]
    dec_w    = w_ref[5 * H:6 * H, :]
    bias_bi  = b_ref[0:1, 0:G]
    bias_uni = b_ref[1:2, 0:G]
    dec_b    = b_ref[2:3, :]

    # ---- Hoisted, time-batched input projections (all off the serial path).
    # TODO(synk): on v6e/v7x these dots could use bf16 operands (f32 accum);
    # kept f32 here for exact reference agreement (and v5e has no bf16 VPU).
    gxF = jnp.dot(x_all, wih_bi_f, preferred_element_type=f32) + bias_bi
    gxB = jnp.dot(x_all, wih_bi_b, preferred_element_type=f32)
    gx_res = jnp.dot(x_all, wih_uni, preferred_element_type=f32) + bias_uni

    # Per-step bi pre-activations: fwd gates from time s, bwd from time T-1-s.
    gx_bi_steps = [gxF[s * N:(s + 1) * N, :] + gxB[(T - 1 - s) * N:(T - s) * N, :]
                   for s in range(T)]

    def cell(gates, c, h):
        # gate columns packed (i, f, o, g): one sigmoid slice + one tanh slice.
        s = jax.nn.sigmoid(gates[:, :3 * h])
        g = jnp.tanh(gates[:, 3 * h:])
        i, f, o = s[:, :h], s[:, h:2 * h], s[:, 2 * h:]
        c_new = f * c + i * g
        return o * jnp.tanh(c_new), c_new

    # ---- Bi-LSTM: both directions advance together in one (N, H) state with
    #      columns [h_fwd | h_bwd]; a single block-diagonal W_hh matmul per
    #      step is the entire serial-chain MXU work.
    h_fb = jnp.zeros((N, H), f32)
    c_fb = jnp.zeros((N, H), f32)
    h_steps = []
    for s in range(T):                                              # static unroll
        g = gx_bi_steps[s] + jnp.dot(h_fb, whh_bi, preferred_element_type=f32)
        h_fb, c_fb = cell(g, c_fb, H)
        h_steps.append(h_fb)

    # ---- Residual already folded into gx_res; add the bi-output term with ONE
    #      batched matmul over all T steps (fwd/bwd concat never touches HBM).
    bi_all = jnp.concatenate(
        [jnp.concatenate([h_steps[t][:, :H2], h_steps[T - 1 - t][:, H2:]], axis=1)
         for t in range(T)], axis=0)                                # (T*N, H)
    gx_uni = gx_res + jnp.dot(bi_all, wih_uni, preferred_element_type=f32)
    gx_uni_steps = [gx_uni[t * N:(t + 1) * N, :] for t in range(T)]

    # ---- Uni-LSTM; per-step max over the torch dim-0 axis stays in vregs.
    h_u = jnp.zeros((N, H), f32)
    c_u = jnp.zeros((N, H), f32)
    row_max = []
    for t in range(T):                                              # static unroll
        g = gx_uni_steps[t] + jnp.dot(h_u, whh_uni, preferred_element_type=f32)
        h_u, c_u = cell(g, c_u, H)
        row_max.append(jnp.max(h_u, axis=0, keepdims=True))         # (1, H)
    maxed = jnp.concatenate(row_max, axis=0)                        # (B, H)
    # dropout: eval-mode identity

    # ---- Decoder (lane-padded to 128): the only HBM store of the kernel.
    o_ref[...] = jnp.dot(maxed, dec_w, preferred_element_type=f32) + dec_b


# --------------------------------------------------------------------------
# Parameters (deterministic init; shapes follow the PyTorch __init__)
# --------------------------------------------------------------------------
def init_params(key, vocab_size, embedding_dim, hidden_dim, filter_size):
    H2 = hidden_dim // 2
    keys = jax.random.split(key, 17)

    def unif(k, shape, scale=0.1):
        return jax.random.uniform(k, shape, jnp.float32, -scale, scale)

    emb = 0.1 * jax.random.normal(keys[0], (vocab_size, embedding_dim), jnp.float32)
    emb = emb.at[0].set(0.0)  # padding_idx=0

    return dict(
        embedding=emb,
        conv_w=unif(keys[1], (hidden_dim, embedding_dim, filter_size)),
        conv_b=unif(keys[2], (hidden_dim,)),
        bi_f_wih=unif(keys[3], (4 * H2, hidden_dim)),
        bi_f_whh=unif(keys[4], (4 * H2, H2)),
        bi_f_bih=unif(keys[5], (4 * H2,)),
        bi_f_bhh=unif(keys[6], (4 * H2,)),
        bi_b_wih=unif(keys[7], (4 * H2, hidden_dim)),
        bi_b_whh=unif(keys[8], (4 * H2, H2)),
        bi_b_bih=unif(keys[9], (4 * H2,)),
        bi_b_bhh=unif(keys[10], (4 * H2,)),
        uni_wih=unif(keys[11], (4 * hidden_dim, hidden_dim)),
        uni_whh=unif(keys[12], (4 * hidden_dim, hidden_dim)),
        uni_bih=unif(keys[13], (4 * hidden_dim,)),
        uni_bhh=unif(keys[14], (4 * hidden_dim,)),
        dec_w=unif(keys[15], (vocab_size, hidden_dim)),
        dec_b=unif(keys[16], (vocab_size,)),
    )


# --------------------------------------------------------------------------
# One-time weight preparation (hoisted out of the per-call jitted forward)
# --------------------------------------------------------------------------
def _reorder_gates_rows(w, h):
    """PyTorch packs LSTM gates (i, f, g, o) along the leading 4h axis.
    Reorder to (i, f, o, g) so sigmoid covers one contiguous slice."""
    return jnp.concatenate([w[0:h], w[h:2 * h], w[3 * h:4 * h], w[2 * h:3 * h]],
                           axis=0)


def _interleave_gates(a, b, h):
    """Interleave per-gate column blocks of two (..., 4h) arrays into
    (..., 8h) with layout [i_a,i_b, f_a,f_b, o_a,o_b, g_a,g_b]."""
    parts = []
    for g in range(4):
        parts.append(a[..., g * h:(g + 1) * h])
        parts.append(b[..., g * h:(g + 1) * h])
    return jnp.concatenate(parts, axis=-1)


def prepare_kernel_params(params, filter_size):
    """Transposes, gate reorders, block-diagonal packing and lane padding,
    done once per model so none of it re-runs on each inference call."""
    H = params['conv_w'].shape[0]
    E = params['conv_w'].shape[1]
    F = filter_size
    H2 = H // 2
    V = params['dec_w'].shape[0]
    lanes = max(4 * H, ((V + 127) // 128) * 128)

    def lstm_w(wih, whh, bih, bhh, h):
        return (_reorder_gates_rows(wih, h).T,                     # (I, 4h)
                _reorder_gates_rows(whh, h).T,                     # (h, 4h)
                _reorder_gates_rows(bih + bhh, h).reshape(1, 4 * h))

    wf_ih, wf_hh, bf = lstm_w(params['bi_f_wih'], params['bi_f_whh'],
                              params['bi_f_bih'], params['bi_f_bhh'], H2)
    wb_ih, wb_hh, bb = lstm_w(params['bi_b_wih'], params['bi_b_whh'],
                              params['bi_b_bih'], params['bi_b_bhh'], H2)
    wu_ih, wu_hh, bu = lstm_w(params['uni_wih'], params['uni_whh'],
                              params['uni_bih'], params['uni_bhh'], H)

    # Combined-direction bi-LSTM layout: gate columns interleaved
    # [i_f,i_b, f_f,f_b, o_f,o_b, g_f,g_b]; hidden/cell columns [h_f | h_b].
    z_ih = jnp.zeros_like(wf_ih)                                   # (H, 4*H2)
    z_hh = jnp.zeros_like(wf_hh)                                   # (H2, 4*H2)
    wih_bi_f = _interleave_gates(wf_ih, z_ih, H2)                  # (H, 4H)
    wih_bi_b = _interleave_gates(z_ih, wb_ih, H2)                  # (H, 4H)
    whh_blk = jnp.concatenate([_interleave_gates(wf_hh, z_hh, H2),
                               _interleave_gates(z_hh, wb_hh, H2)], axis=0)
    bias_bi = _interleave_gates(bf, bb, H2)                        # (1, 4H)

    def pad_lanes(w):
        out = jnp.zeros((w.shape[0], lanes), jnp.float32)
        return out.at[:, :w.shape[1]].set(w)

    w_stack = jnp.concatenate([
        pad_lanes(wih_bi_f), pad_lanes(wih_bi_b), pad_lanes(whh_blk),
        pad_lanes(wu_ih), pad_lanes(wu_hh),
        pad_lanes(params['dec_w'].T)], axis=0)                     # (6H, lanes)

    b_stack = jnp.concatenate([
        pad_lanes(bias_bi), pad_lanes(bu),
        pad_lanes(params['dec_b'].reshape(1, V)),
        pad_lanes(params['conv_b'].reshape(1, H))], axis=0)        # (4, lanes)

    conv_w = jnp.transpose(params['conv_w'], (2, 1, 0)).reshape(F * E, H)

    return dict(embedding=params['embedding'], conv_w=conv_w,
                w_stack=w_stack, b_stack=b_stack)


# --------------------------------------------------------------------------
# Forward pass (mirrors BaseLine_enc_dec.forward) — one fused pallas_call
# --------------------------------------------------------------------------
def forward(prepped, x_tokens, *, filter_size, vocab_size):
    S, B = x_tokens.shape
    F = filter_size
    E = prepped['embedding'].shape[1]
    H = prepped['conv_w'].shape[1]
    L = S - F + 1
    lanes = prepped['w_stack'].shape[1]

    # Embedding gather + im2col slab built in the wrapper (XLA gather/reshape)
    # so the kernel does a single dense (B*L, F*E) @ (F*E, H) conv matmul.
    emb_bt = prepped['embedding'][x_tokens.T]                      # (B, S, E)
    xcol = jnp.concatenate([emb_bt[:, k:k + L, :] for k in range(F)],
                           axis=-1).reshape(B * L, F * E)          # (B*L, F*E)

    # TODO(synk): everything fits trivially in VMEM at these shapes on
    # v5e/v6e/v7x; if vocab/hidden/seq grow, tile the decoder over V with a
    # grid + BlockSpec and set pltpu.CompilerParams(vmem_limit_bytes=...)
    # (v7x has only 64 MiB physical VMEM).  Cross-TC sharding of the two
    # bi-LSTM directions is intentionally skipped — the block-diagonal W_hh
    # captures that parallelism with zero sync.
    kernel = functools.partial(fused_forward_kernel, B=B, H=H, L=L)
    out = pl.pallas_call(
        kernel,
        out_shape=jax.ShapeDtypeStruct((B, lanes), jnp.float32),
        in_specs=[_vmem()] * 4,
        out_specs=_vmem(),
    )(xcol, prepped['conv_w'], prepped['w_stack'], prepped['b_stack'])

    # TODO(synk): reference ends with `x.transpose(1, 2)` on a 2-D (B, V)
    # tensor, which is invalid in PyTorch (dim out of range); returning (B, V).
    return out[:, :vocab_size]


# --------------------------------------------------------------------------
# Pure-JAX reference (mirrors the PyTorch graph) for a correctness check
# --------------------------------------------------------------------------
def _lstm_ref(x_tm, wih, whh, bih, bhh):
    T, N, _ = x_tm.shape
    Hh = whh.shape[1]
    h = jnp.zeros((N, Hh), jnp.float32)
    c = jnp.zeros((N, Hh), jnp.float32)
    outs = []
    for t in range(T):
        gates = x_tm[t] @ wih.T + h @ whh.T + bih + bhh
        i = jax.nn.sigmoid(gates[:, :Hh])
        f = jax.nn.sigmoid(gates[:, Hh:2 * Hh])
        g = jnp.tanh(gates[:, 2 * Hh:3 * Hh])
        o = jax.nn.sigmoid(gates[:, 3 * Hh:])
        c = f * c + i * g
        h = o * jnp.tanh(c)
        outs.append(h)
    return jnp.stack(outs, axis=0)


def reference_forward(params, x_tokens, F):
    S, B = x_tokens.shape
    H = params['conv_w'].shape[0]
    L = S - F + 1
    emb = params['embedding'][x_tokens]                            # (S, B, E)
    cols = jnp.stack([emb[k:k + L] for k in range(F)], axis=-1)    # (L,B,E,F)
    conv = jnp.einsum('lbef,hef->lbh', cols, params['conv_w']) + params['conv_b']
    x = jnp.maximum(conv, 0.0)                                     # (L, B, H)
    x_res = x
    x_tm = jnp.transpose(x, (1, 0, 2))                             # (B, L, H)
    fwd = _lstm_ref(x_tm, params['bi_f_wih'], params['bi_f_whh'],
                    params['bi_f_bih'], params['bi_f_bhh'])
    bwd = _lstm_ref(x_tm[::-1], params['bi_b_wih'], params['bi_b_whh'],
                    params['bi_b_bih'], params['bi_b_bhh'])[::-1]
    bi = jnp.transpose(jnp.concatenate([fwd, bwd], axis=-1), (1, 0, 2))
    y_tm = jnp.transpose(bi + x_res, (1, 0, 2))
    uni = jnp.transpose(_lstm_ref(y_tm, params['uni_wih'], params['uni_whh'],
                                  params['uni_bih'], params['uni_bhh']), (1, 0, 2))
    xm = jnp.max(uni, axis=0)                                      # (B, H)
    return xm @ params['dec_w'].T + params['dec_b']


if __name__ == "__main__":
    vocab_size = 50
    embedding_dim = 16
    hidden_dim = 32          # bidirectional hidden = 16
    filter_size = 3
    # dropout_rate = 0.1     # eval mode -> identity

    S, B = 12, 4             # token input: (seq_len, batch) int32
    key = jax.random.PRNGKey(0)
    pkey, xkey = jax.random.split(key)
    params = init_params(pkey, vocab_size, embedding_dim, hidden_dim, filter_size)
    x_tokens = jax.random.randint(xkey, (S, B), 0, vocab_size, dtype=jnp.int32)

    prepped = prepare_kernel_params(params, filter_size)   # one-time weight prep
    fn = jax.jit(functools.partial(forward, filter_size=filter_size,
                                   vocab_size=vocab_size))
    out = jax.block_until_ready(fn(prepped, x_tokens))
    assert out.shape == (B, vocab_size), out.shape
    assert bool(jnp.all(jnp.isfinite(out)))

    ref = reference_forward(params, x_tokens, filter_size)
    assert bool(jnp.allclose(out, ref, rtol=1e-3, atol=1e-3)), (
        float(jnp.max(jnp.abs(out - ref))))
    print("KERNEL_OK")
</pallas_src>

<mosaic_0001>
module attributes {stable_mosaic.version = 11 : i64} {
  func.func @fused_forward_kernel(%arg0: memref<40x48xf32, #tpu.memory_space<vmem>>, %arg1: memref<48x32xf32, #tpu.memory_space<vmem>>, %arg2: memref<192x128xf32, #tpu.memory_space<vmem>>, %arg3: memref<4x128xf32, #tpu.memory_space<vmem>>, %arg4: memref<4x128xf32, #tpu.memory_space<vmem>>) attributes {dimension_semantics = [], scalar_prefetch = 0 : i64, scratch_operands = 0 : i64, tpu.core_type = #tpu.core_type<tc>} {
    %c3 = arith.constant 3 : index
    %c0 = arith.constant 0 : index
    %0 = vector.load %arg3[%c3, %c0] : memref<4x128xf32, #tpu.memory_space<vmem>>, vector<1x32xf32>
    %c0_0 = arith.constant 0 : index
    %c0_1 = arith.constant 0 : index
    %1 = vector.load %arg0[%c0_0, %c0_1] : memref<40x48xf32, #tpu.memory_space<vmem>>, vector<40x48xf32>
    %c0_2 = arith.constant 0 : index
    %c0_3 = arith.constant 0 : index
    %2 = vector.load %arg1[%c0_2, %c0_3] : memref<48x32xf32, #tpu.memory_space<vmem>>, vector<48x32xf32>
    %cst = arith.constant dense<0.000000e+00> : vector<40x32xf32>
    %3 = tpu.matmul %1, %2, %cst {dimension_numbers = #tpu.dot_dimension_numbers<[1], [0], [0], [1], [0, 0, 1, 1], [], []>} : vector<40x48xf32>, vector<48x32xf32>, vector<40x32xf32> -> vector<40x32xf32>
    %4 = vector.broadcast %0 : vector<1x32xf32> to vector<40x32xf32>
    %5 = arith.addf %3, %4 : vector<40x32xf32>
    %cst_4 = arith.constant 0.000000e+00 : f32
    %6 = vector.broadcast %cst_4 : f32 to vector<40x32xf32>
    %7 = arith.maximumf %5, %6 : vector<40x32xf32>
    %c0_5 = arith.constant 0 : index
    %c0_6 = arith.constant 0 : index
    %8 = vector.load %arg2[%c0_5, %c0_6] : memref<192x128xf32, #tpu.memory_space<vmem>>, vector<32x128xf32>
    %c32 = arith.constant 32 : index
    %c0_7 = arith.constant 0 : index
    %9 = vector.load %arg2[%c32, %c0_7] : memref<192x128xf32, #tpu.memory_space<vmem>>, vector<32x128xf32>
    %c64 = arith.constant 64 : index
    %c0_8 = arith.constant 0 : index
    %10 = vector.load %arg2[%c64, %c0_8] : memref<192x128xf32, #tpu.memory_space<vmem>>, vector<32x128xf32>
    %c96 = arith.constant 96 : index
    %c0_9 = arith.constant 0 : index
    %11 = vector.load %arg2[%c96, %c0_9] : memref<192x128xf32, #tpu.memory_space<vmem>>, vector<32x128xf32>
    %c128 = arith.constant 128 : index
    %c0_10 = arith.constant 0 : index
    %12 = vector.load %arg2[%c128, %c0_10] : memref<192x128xf32, #tpu.memory_space<vmem>>, vector<32x128xf32>
    %c160 = arith.constant 160 : index
    %c0_11 = arith.constant 0 : index
    %13 = vector.load %arg2[%c160, %c0_11] : memref<192x128xf32, #tpu.memory_space<vmem>>, vector<32x128xf32>
    %c0_12 = arith.constant 0 : index
    %c0_13 = arith.constant 0 : index
    %14 = vector.load %arg3[%c0_12, %c0_13] : memref<4x128xf32, #tpu.memory_space<vmem>>, vector<1x128xf32>
    %c1 = arith.constant 1 : index
    %c0_14 = arith.constant 0 : index
    %15 = vector.load %arg3[%c1, %c0_14] : memref<4x128xf32, #tpu.memory_space<vmem>>, vector<1x128xf32>
    %c2 = arith.constant 2 : index
    %c0_15 = arith.constant 0 : index
    %16 = vector.load %arg3[%c2, %c0_15] : memref<4x128xf32, #tpu.memory_space<vmem>>, vector<1x128xf32>
    %cst_16 = arith.constant dense<0.000000e+00> : vector<40x128xf32>
    %17 = tpu.matmul %7, %8, %cst_16 {dimension_numbers = #tpu.dot_dimension_numbers<[1], [0], [0], [1], [0, 0, 1, 1], [], []>} : vector<40x32xf32>, vector<32x128xf32>, vector<40x128xf32> -> vector<40x128xf32>
    %18 = vector.broadcast %14 : vector<1x128xf32> to vector<40x128xf32>
    %19 = arith.addf %17, %18 : vector<40x128xf32>
    %cst_17 = arith.constant dense<0.000000e+00> : vector<40x128xf32>
    %20 = tpu.matmul %7, %9, %cst_17 {dimension_numbers = #tpu.dot_dimension_numbers<[1], [0], [0], [1], [0, 0, 1, 1], [], []>} : vector<40x32xf32>, vector<32x128xf32>, vector<40x128xf32> -> vector<40x128xf32>
    %cst_18 = arith.constant dense<0.000000e+00> : vector<40x128xf32>
    %21 = tpu.matmul %7, %11, %cst_18 {dimension_numbers = #tpu.dot_dimension_numbers<[1], [0], [0], [1], [0, 0, 1, 1], [], []>} : vector<40x32xf32>, vector<32x128xf32>, vector<40x128xf32> -> vector<40x128xf32>
    %22 = vector.broadcast %15 : vector<1x128xf32> to vector<40x128xf32>
    %23 = arith.addf %21, %22 : vector<40x128xf32>
    %24 = vector.extract_strided_slice %19 {offsets = [0, 0], sizes = [10, 128], strides = [1, 1]} : vector<40x128xf32> to vector<10x128xf32>
    %25 = vector.extract_strided_slice %20 {offsets = [30, 0], sizes = [10, 128], strides = [1, 1]} : vector<40x128xf32> to vector<10x128xf32>
    %26 = arith.addf %24, %25 : vector<10x128xf32>
    %27 = vector.extract_strided_slice %19 {offsets = [10, 0], sizes = [10, 128], strides = [1, 1]} : vector<40x128xf32> to vector<10x128xf32>
    %28 = vector.extract_strided_slice %20 {offsets = [20, 0], sizes = [10, 128], strides = [1, 1]} : vector<40x128xf32> to vector<10x128xf32>
    %29 = arith.addf %27, %28 : vector<10x128xf32>
    %30 = vector.extract_strided_slice %19 {offsets = [20, 0], sizes = [10, 128], strides = [1, 1]} : vector<40x128xf32> to vector<10x128xf32>
    %31 = vector.extract_strided_slice %20 {offsets = [10, 0], sizes = [10, 128], strides = [1, 1]} : vector<40x128xf32> to vector<10x128xf32>
    %32 = arith.addf %30, %31 : vector<10x128xf32>
    %33 = vector.extract_strided_slice %19 {offsets = [30, 0], sizes = [10, 128], strides = [1, 1]} : vector<40x128xf32> to vector<10x128xf32>
    %34 = vector.extract_strided_slice %20 {offsets = [0, 0], sizes = [10, 128], strides = [1, 1]} : vector<40x128xf32> to vector<10x128xf32>
    %35 = arith.addf %33, %34 : vector<10x128xf32>
    %cst_19 = arith.constant 0.000000e+00 : f32
    %36 = vector.broadcast %cst_19 : f32 to vector<10x32xf32>
    %cst_20 = arith.constant 0.000000e+00 : f32
    %37 = vector.broadcast %cst_20 : f32 to vector<10x32xf32>
    %cst_21 = arith.constant dense<0.000000e+00> : vector<10x128xf32>
    %38 = tpu.matmul %36, %10, %cst_21 {dimension_numbers = #tpu.dot_dimension_numbers<[1], [0], [0], [1], [0, 0, 1, 1], [], []>} : vector<10x32xf32>, vector<32x128xf32>, vector<10x128xf32> -> vector<10x128xf32>
    %39 = arith.addf %26, %38 : vector<10x128xf32>
    %40 = vector.extract_strided_slice %39 {offsets = [0, 0], sizes = [10, 96], strides = [1, 1]} : vector<10x128xf32> to vector<10x96xf32>
    %41 = arith.negf %40 : vector<10x96xf32>
    %42 = math.exp %41 : vector<10x96xf32>
    %cst_22 = arith.constant 1.000000e+00 : f32
    %43 = vector.broadcast %cst_22 : f32 to vector<10x96xf32>
    %44 = arith.addf %43, %42 : vector<10x96xf32>
    %45 = arith.divf %43, %44 : vector<10x96xf32>
    %46 = vector.extract_strided_slice %39 {offsets = [0, 96], sizes = [10, 32], strides = [1, 1]} : vector<10x128xf32> to vector<10x32xf32>
    %47 = math.tanh %46 : vector<10x32xf32>
    %48 = vector.extract_strided_slice %45 {offsets = [0, 0], sizes = [10, 32], strides = [1, 1]} : vector<10x96xf32> to vector<10x32xf32>
    %49 = vector.extract_strided_slice %45 {offsets = [0, 32], sizes = [10, 32], strides = [1, 1]} : vector<10x96xf32> to vector<10x32xf32>
    %50 = vector.extract_strided_slice %45 {offsets = [0, 64], sizes = [10, 32], strides = [1, 1]} : vector<10x96xf32> to vector<10x32xf32>
    %51 = arith.mulf %49, %37 : vector<10x32xf32>
    %52 = arith.mulf %48, %47 : vector<10x32xf32>
    %53 = arith.addf %51, %52 : vector<10x32xf32>
    %54 = math.tanh %53 : vector<10x32xf32>
    %55 = arith.mulf %50, %54 : vector<10x32xf32>
    %cst_23 = arith.constant dense<0.000000e+00> : vector<10x128xf32>
    %56 = tpu.matmul %55, %10, %cst_23 {dimension_numbers = #tpu.dot_dimension_numbers<[1], [0], [0], [1], [0, 0, 1, 1], [], []>} : vector<10x32xf32>, vector<32x128xf32>, vector<10x128xf32> -> vector<10x128xf32>
    %57 = arith.addf %29, %56 : vector<10x128xf32>
    %58 = vector.extract_strided_slice %57 {offsets = [0, 0], sizes = [10, 96], strides = [1, 1]} : vector<10x128xf32> to vector<10x96xf32>
    %59 = arith.negf %58 : vector<10x96xf32>
    %60 = math.exp %59 : vector<10x96xf32>
    %cst_24 = arith.constant 1.000000e+00 : f32
    %61 = vector.broadcast %cst_24 : f32 to vector<10x96xf32>
    %62 = arith.addf %61, %60 : vector<10x96xf32>
    %63 = arith.divf %61, %62 : vector<10x96xf32>
    %64 = vector.extract_strided_slice %57 {offsets = [0, 96], sizes = [10, 32], strides = [1, 1]} : vector<10x128xf32> to vector<10x32xf32>
    %65 = math.tanh %64 : vector<10x32xf32>
    %66 = vector.extract_strided_slice %63 {offsets = [0, 0], sizes = [10, 32], strides = [1, 1]} : vector<10x96xf32> to vector<10x32xf32>
    %67 = vector.extract_strided_slice %63 {offsets = [0, 32], sizes = [10, 32], strides = [1, 1]} : vector<10x96xf32> to vector<10x32xf32>
    %68 = vector.extract_strided_slice %63 {offsets = [0, 64], sizes = [10, 32], strides = [1, 1]} : vector<10x96xf32> to vector<10x32xf32>
    %69 = arith.mulf %67, %53 : vector<10x32xf32>
    %70 = arith.mulf %66, %65 : vector<10x32xf32>
    %71 = arith.addf %69, %70 : vector<10x32xf32>
    %72 = math.tanh %71 : vector<10x32xf32>
    %73 = arith.mulf %68, %72 : vector<10x32xf32>
    %cst_25 = arith.constant dense<0.000000e+00> : vector<10x128xf32>
    %74 = tpu.matmul %73, %10, %cst_25 {dimension_numbers = #tpu.dot_dimension_numbers<[1], [0], [0], [1], [0, 0, 1, 1], [], []>} : vector<10x32xf32>, vector<32x128xf32>, vector<10x128xf32> -> vector<10x128xf32>
    %75 = arith.addf %32, %74 : vector<10x128xf32>
    %76 = vector.extract_strided_slice %75 {offsets = [0, 0], sizes = [10, 96], strides = [1, 1]} : vector<10x128xf32> to vector<10x96xf32>
    %77 = arith.negf %76 : vector<10x96xf32>
    %78 = math.exp %77 : vector<10x96xf32>
    %cst_26 = arith.constant 1.000000e+00 : f32
    %79 = vector.broadcast %cst_26 : f32 to vector<10x96xf32>
    %80 = arith.addf %79, %78 : vector<10x96xf32>
    %81 = arith.divf %79, %80 : vector<10x96xf32>
    %82 = vector.extract_strided_slice %75 {offsets = [0, 96], sizes = [10, 32], strides = [1, 1]} : vector<10x128xf32> to vector<10x32xf32>
    %83 = math.tanh %82 : vector<10x32xf32>
    %84 = vector.extract_strided_slice %81 {offsets = [0, 0], sizes = [10, 32], strides = [1, 1]} : vector<10x96xf32> to vector<10x32xf32>
    %85 = vector.extract_strided_slice %81 {offsets = [0, 32], sizes = [10, 32], strides = [1, 1]} : vector<10x96xf32> to vector<10x32xf32>
    %86 = vector.extract_strided_slice %81 {offsets = [0, 64], sizes = [10, 32], strides = [1, 1]} : vector<10x96xf32> to vector<10x32xf32>
    %87 = arith.mulf %85, %71 : vector<10x32xf32>
    %88 = arith.mulf %84, %83 : vector<10x32xf32>
    %89 = arith.addf %87, %88 : vector<10x32xf32>
    %90 = math.tanh %89 : vector<10x32xf32>
    %91 = arith.mulf %86, %90 : vector<10x32xf32>
    %cst_27 = arith.constant dense<0.000000e+00> : vector<10x128xf32>
    %92 = tpu.matmul %91, %10, %cst_27 {dimension_numbers = #tpu.dot_dimension_numbers<[1], [0], [0], [1], [0, 0, 1, 1], [], []>} : vector<10x32xf32>, vector<32x128xf32>, vector<10x128xf32> -> vector<10x128xf32>
    %93 = arith.addf %35, %92 : vector<10x128xf32>
    %94 = vector.extract_strided_slice %93 {offsets = [0, 0], sizes = [10, 96], strides = [1, 1]} : vector<10x128xf32> to vector<10x96xf32>
    %95 = arith.negf %94 : vector<10x96xf32>
    %96 = math.exp %95 : vector<10x96xf32>
    %cst_28 = arith.constant 1.000000e+00 : f32
    %97 = vector.broadcast %cst_28 : f32 to vector<10x96xf32>
    %98 = arith.addf %97, %96 : vector<10x96xf32>
    %99 = arith.divf %97, %98 : vector<10x96xf32>
    %100 = vector.extract_strided_slice %93 {offsets = [0, 96], sizes = [10, 32], strides = [1, 1]} : vector<10x128xf32> to vector<10x32xf32>
    %101 = math.tanh %100 : vector<10x32xf32>
    %102 = vector.extract_strided_slice %99 {offsets = [0, 0], sizes = [10, 32], strides = [1, 1]} : vector<10x96xf32> to vector<10x32xf32>
    %103 = vector.extract_strided_slice %99 {offsets = [0, 32], sizes = [10, 32], strides = [1, 1]} : vector<10x96xf32> to vector<10x32xf32>
    %104 = vector.extract_strided_slice %99 {offsets = [0, 64], sizes = [10, 32], strides = [1, 1]} : vector<10x96xf32> to vector<10x32xf32>
    %105 = arith.mulf %103, %89 : vector<10x32xf32>
    %106 = arith.mulf %102, %101 : vector<10x32xf32>
    %107 = arith.addf %105, %106 : vector<10x32xf32>
    %108 = math.tanh %107 : vector<10x32xf32>
    %109 = arith.mulf %104, %108 : vector<10x32xf32>
    %110 = vector.extract_strided_slice %55 {offsets = [0, 0], sizes = [10, 16], strides = [1, 1]} : vector<10x32xf32> to vector<10x16xf32>
    %111 = vector.extract_strided_slice %109 {offsets = [0, 16], sizes = [10, 16], strides = [1, 1]} : vector<10x32xf32> to vector<10x16xf32>
    %112 = tpu.concatenate %110, %111 in 1 : vector<10x16xf32>, vector<10x16xf32> -> vector<10x32xf32>
    %113 = vector.extract_strided_slice %73 {offsets = [0, 0], sizes = [10, 16], strides = [1, 1]} : vector<10x32xf32> to vector<10x16xf32>
    %114 = vector.extract_strided_slice %91 {offsets = [0, 16], sizes = [10, 16], strides = [1, 1]} : vector<10x32xf32> to vector<10x16xf32>
    %115 = tpu.concatenate %113, %114 in 1 : vector<10x16xf32>, vector<10x16xf32> -> vector<10x32xf32>
    %116 = vector.extract_strided_slice %91 {offsets = [0, 0], sizes = [10, 16], strides = [1, 1]} : vector<10x32xf32> to vector<10x16xf32>
    %117 = vector.extract_strided_slice %73 {offsets = [0, 16], sizes = [10, 16], strides = [1, 1]} : vector<10x32xf32> to vector<10x16xf32>
    %118 = tpu.concatenate %116, %117 in 1 : vector<10x16xf32>, vector<10x16xf32> -> vector<10x32xf32>
    %119 = vector.extract_strided_slice %109 {offsets = [0, 0], sizes = [10, 16], strides = [1, 1]} : vector<10x32xf32> to vector<10x16xf32>
    %120 = vector.extract_strided_slice %55 {offsets = [0, 16], sizes = [10, 16], strides = [1, 1]} : vector<10x32xf32> to vector<10x16xf32>
    %121 = tpu.concatenate %119, %120 in 1 : vector<10x16xf32>, vector<10x16xf32> -> vector<10x32xf32>
    %122 = tpu.concatenate %112, %115, %118, %121 in 0 : vector<10x32xf32>, vector<10x32xf32>, vector<10x32xf32>, vector<10x32xf32> -> vector<40x32xf32>
    %cst_29 = arith.constant dense<0.000000e+00> : vector<40x128xf32>
    %123 = tpu.matmul %122, %11, %cst_29 {dimension_numbers = #tpu.dot_dimension_numbers<[1], [0], [0], [1], [0, 0, 1, 1], [], []>} : vector<40x32xf32>, vector<32x128xf32>, vector<40x128xf32> -> vector<40x128xf32>
    %124 = arith.addf %23, %123 : vector<40x128xf32>
    %125 = vector.extract_strided_slice %124 {offsets = [0, 0], sizes = [10, 128], strides = [1, 1]} : vector<40x128xf32> to vector<10x128xf32>
    %126 = vector.extract_strided_slice %124 {offsets = [10, 0], sizes = [10, 128], strides = [1, 1]} : vector<40x128xf32> to vector<10x128xf32>
    %127 = vector.extract_strided_slice %124 {offsets = [20, 0], sizes = [10, 128], strides = [1, 1]} : vector<40x128xf32> to vector<10x128xf32>
    %128 = vector.extract_strided_slice %124 {offsets = [30, 0], sizes = [10, 128], strides = [1, 1]} : vector<40x128xf32> to vector<10x128xf32>
    %cst_30 = arith.constant 0.000000e+00 : f32
    %129 = vector.broadcast %cst_30 : f32 to vector<10x32xf32>
    %cst_31 = arith.constant 0.000000e+00 : f32
    %130 = vector.broadcast %cst_31 : f32 to vector<10x32xf32>
    %cst_32 = arith.constant dense<0.000000e+00> : vector<10x128xf32>
    %131 = tpu.matmul %129, %12, %cst_32 {dimension_numbers = #tpu.dot_dimension_numbers<[1], [0], [0], [1], [0, 0, 1, 1], [], []>} : vector<10x32xf32>, vector<32x128xf32>, vector<10x128xf32> -> vector<10x128xf32>
    %132 = arith.addf %125, %131 : vector<10x128xf32>
    %133 = vector.extract_strided_slice %132 {offsets = [0, 0], sizes = [10, 96], strides = [1, 1]} : vector<10x128xf32> to vector<10x96xf32>
    %134 = arith.negf %133 : vector<10x96xf32>
    %135 = math.exp %134 : vector<10x96xf32>
    %cst_33 = arith.constant 1.000000e+00 : f32
    %136 = vector.broadcast %cst_33 : f32 to vector<10x96xf32>
    %137 = arith.addf %136, %135 : vector<10x96xf32>
    %138 = arith.divf %136, %137 : vector<10x96xf32>
    %139 = vector.extract_strided_slice %132 {offsets = [0, 96], sizes = [10, 32], strides = [1, 1]} : vector<10x128xf32> to vector<10x32xf32>
    %140 = math.tanh %139 : vector<10x32xf32>
    %141 = vector.extract_strided_slice %138 {offsets = [0, 0], sizes = [10, 32], strides = [1, 1]} : vector<10x96xf32> to vector<10x32xf32>
    %142 = vector.extract_strided_slice %138 {offsets = [0, 32], sizes = [10, 32], strides = [1, 1]} : vector<10x96xf32> to vector<10x32xf32>
    %143 = vector.extract_strided_slice %138 {offsets = [0, 64], sizes = [10, 32], strides = [1, 1]} : vector<10x96xf32> to vector<10x32xf32>
    %144 = arith.mulf %142, %130 : vector<10x32xf32>
    %145 = arith.mulf %141, %140 : vector<10x32xf32>
    %146 = arith.addf %144, %145 : vector<10x32xf32>
    %147 = math.tanh %146 : vector<10x32xf32>
    %148 = arith.mulf %143, %147 : vector<10x32xf32>
    %cst_34 = arith.constant dense<0xFF800000> : vector<32xf32>
    %149 = vector.multi_reduction <maximumf>, %148, %cst_34 [0] : vector<10x32xf32> to vector<32xf32>
    %150 = vector.shape_cast %149 : vector<32xf32> to vector<1x32xf32>
    %cst_35 = arith.constant dense<0.000000e+00> : vector<10x128xf32>
    %151 = tpu.matmul %148, %12, %cst_35 {dimension_numbers = #tpu.dot_dimension_numbers<[1], [0], [0], [1], [0, 0, 1, 1], [], []>} : vector<10x32xf32>, vector<32x128xf32>, vector<10x128xf32> -> vector<10x128xf32>
    %152 = arith.addf %126, %151 : vector<10x128xf32>
    %153 = vector.extract_strided_slice %152 {offsets = [0, 0], sizes = [10, 96], strides = [1, 1]} : vector<10x128xf32> to vector<10x96xf32>
    %154 = arith.negf %153 : vector<10x96xf32>
    %155 = math.exp %154 : vector<10x96xf32>
    %cst_36 = arith.constant 1.000000e+00 : f32
    %156 = vector.broadcast %cst_36 : f32 to vector<10x96xf32>
    %157 = arith.addf %156, %155 : vector<10x96xf32>
    %158 = arith.divf %156, %157 : vector<10x96xf32>
    %159 = vector.extract_strided_slice %152 {offsets = [0, 96], sizes = [10, 32], strides = [1, 1]} : vector<10x128xf32> to vector<10x32xf32>
    %160 = math.tanh %159 : vector<10x32xf32>
    %161 = vector.extract_strided_slice %158 {offsets = [0, 0], sizes = [10, 32], strides = [1, 1]} : vector<10x96xf32> to vector<10x32xf32>
    %162 = vector.extract_strided_slice %158 {offsets = [0, 32], sizes = [10, 32], strides = [1, 1]} : vector<10x96xf32> to vector<10x32xf32>
    %163 = vector.extract_strided_slice %158 {offsets = [0, 64], sizes = [10, 32], strides = [1, 1]} : vector<10x96xf32> to vector<10x32xf32>
    %164 = arith.mulf %162, %146 : vector<10x32xf32>
    %165 = arith.mulf %161, %160 : vector<10x32xf32>
    %166 = arith.addf %164, %165 : vector<10x32xf32>
    %167 = math.tanh %166 : vector<10x32xf32>
    %168 = arith.mulf %163, %167 : vector<10x32xf32>
    %cst_37 = arith.constant dense<0xFF800000> : vector<32xf32>
    %169 = vector.multi_reduction <maximumf>, %168, %cst_37 [0] : vector<10x32xf32> to vector<32xf32>
    %170 = vector.shape_cast %169 : vector<32xf32> to vector<1x32xf32>
    %cst_38 = arith.constant dense<0.000000e+00> : vector<10x128xf32>
    %171 = tpu.matmul %168, %12, %cst_38 {dimension_numbers = #tpu.dot_dimension_numbers<[1], [0], [0], [1], [0, 0, 1, 1], [], []>} : vector<10x32xf32>, vector<32x128xf32>, vector<10x128xf32> -> vector<10x128xf32>
    %172 = arith.addf %127, %171 : vector<10x128xf32>
    %173 = vector.extract_strided_slice %172 {offsets = [0, 0], sizes = [10, 96], strides = [1, 1]} : vector<10x128xf32> to vector<10x96xf32>
    %174 = arith.negf %173 : vector<10x96xf32>
    %175 = math.exp %174 : vector<10x96xf32>
    %cst_39 = arith.constant 1.000000e+00 : f32
    %176 = vector.broadcast %cst_39 : f32 to vector<10x96xf32>
    %177 = arith.addf %176, %175 : vector<10x96xf32>
    %178 = arith.divf %176, %177 : vector<10x96xf32>
    %179 = vector.extract_strided_slice %172 {offsets = [0, 96], sizes = [10, 32], strides = [1, 1]} : vector<10x128xf32> to vector<10x32xf32>
    %180 = math.tanh %179 : vector<10x32xf32>
    %181 = vector.extract_strided_slice %178 {offsets = [0, 0], sizes = [10, 32], strides = [1, 1]} : vector<10x96xf32> to vector<10x32xf32>
    %182 = vector.extract_strided_slice %178 {offsets = [0, 32], sizes = [10, 32], strides = [1, 1]} : vector<10x96xf32> to vector<10x32xf32>
    %183 = vector.extract_strided_slice %178 {offsets = [0, 64], sizes = [10, 32], strides = [1, 1]} : vector<10x96xf32> to vector<10x32xf32>
    %184 = arith.mulf %182, %166 : vector<10x32xf32>
    %185 = arith.mulf %181, %180 : vector<10x32xf32>
    %186 = arith.addf %184, %185 : vector<10x32xf32>
    %187 = math.tanh %186 : vector<10x32xf32>
    %188 = arith.mulf %183, %187 : vector<10x32xf32>
    %cst_40 = arith.constant dense<0xFF800000> : vector<32xf32>
    %189 = vector.multi_reduction <maximumf>, %188, %cst_40 [0] : vector<10x32xf32> to vector<32xf32>
    %190 = vector.shape_cast %189 : vector<32xf32> to vector<1x32xf32>
    %cst_41 = arith.constant dense<0.000000e+00> : vector<10x128xf32>
    %191 = tpu.matmul %188, %12, %cst_41 {dimension_numbers = #tpu.dot_dimension_numbers<[1], [0], [0], [1], [0, 0, 1, 1], [], []>} : vector<10x32xf32>, vector<32x128xf32>, vector<10x128xf32> -> vector<10x128xf32>
    %192 = arith.addf %128, %191 : vector<10x128xf32>
    %193 = vector.extract_strided_slice %192 {offsets = [0, 0], sizes = [10, 96], strides = [1, 1]} : vector<10x128xf32> to vector<10x96xf32>
    %194 = arith.negf %193 : vector<10x96xf32>
    %195 = math.exp %194 : vector<10x96xf32>
    %cst_42 = arith.constant 1.000000e+00 : f32
    %196 = vector.broadcast %cst_42 : f32 to vector<10x96xf32>
    %197 = arith.addf %196, %195 : vector<10x96xf32>
    %198 = arith.divf %196, %197 : vector<10x96xf32>
    %199 = vector.extract_strided_slice %192 {offsets = [0, 96], sizes = [10, 32], strides = [1, 1]} : vector<10x128xf32> to vector<10x32xf32>
    %200 = math.tanh %199 : vector<10x32xf32>
    %201 = vector.extract_strided_slice %198 {offsets = [0, 0], sizes = [10, 32], strides = [1, 1]} : vector<10x96xf32> to vector<10x32xf32>
    %202 = vector.extract_strided_slice %198 {offsets = [0, 32], sizes = [10, 32], strides = [1, 1]} : vector<10x96xf32> to vector<10x32xf32>
    %203 = vector.extract_strided_slice %198 {offsets = [0, 64], sizes = [10, 32], strides = [1, 1]} : vector<10x96xf32> to vector<10x32xf32>
    %204 = arith.mulf %202, %186 : vector<10x32xf32>
    %205 = arith.mulf %201, %200 : vector<10x32xf32>
    %206 = arith.addf %204, %205 : vector<10x32xf32>
    %207 = math.tanh %206 : vector<10x32xf32>
    %208 = arith.mulf %203, %207 : vector<10x32xf32>
    %cst_43 = arith.constant dense<0xFF800000> : vector<32xf32>
    %209 = vector.multi_reduction <maximumf>, %208, %cst_43 [0] : vector<10x32xf32> to vector<32xf32>
    %210 = vector.shape_cast %209 : vector<32xf32> to vector<1x32xf32>
    %211 = tpu.concatenate %150, %170, %190, %210 in 0 : vector<1x32xf32>, vector<1x32xf32>, vector<1x32xf32>, vector<1x32xf32> -> vector<4x32xf32>
    %cst_44 = arith.constant dense<0.000000e+00> : vector<4x128xf32>
    %212 = tpu.matmul %211, %13, %cst_44 {dimension_numbers = #tpu.dot_dimension_numbers<[1], [0], [0], [1], [0, 0, 1, 1], [], []>} : vector<4x32xf32>, vector<32x128xf32>, vector<4x128xf32> -> vector<4x128xf32>
    %213 = vector.broadcast %16 : vector<1x128xf32> to vector<4x128xf32>
    %214 = arith.addf %212, %213 : vector<4x128xf32>
    %c0_45 = arith.constant 0 : index
    %c0_46 = arith.constant 0 : index
    %215 = vector.load %arg4[%c0_45, %c0_46] : memref<4x128xf32, #tpu.memory_space<vmem>>, vector<4x128xf32>
    tpu.vector_store %arg4[%c0_45, %c0_46], %214 {strides = array<i32>} : memref<4x128xf32, #tpu.memory_space<vmem>>, vector<4x128xf32>,
    return
  }
}

</mosaic_0001>

<llo_original>
// kernel: forward.1
$region0: #{forward.1}
  #allocation0 [shape = 'u32[]', space=smem, size = 0x4, offset = 0x4, fixed_abs, tag = 'smem constant byte address 0x4 - core index']
  #allocation1 [shape = 'u32[144,128]{1,0:T(1,128)}', space=vmem, size = 0x12000, scoped, tag = 'internal scratch']
  %s0 = inlined_call_operand.vmem [shape: f32[40,48], index: 0, kind: input, shape index: {}]
  %s1 = inlined_call_operand.vmem [shape: f32[48,32], index: 1, kind: input, shape index: {}]
  %s2 = inlined_call_operand.vmem [shape: f32[192,128], index: 2, kind: input, shape index: {}]
  %s3 = inlined_call_operand.vmem [shape: f32[4,128], index: 3, kind: input, shape index: {}]
  %s4 = inlined_call_operand.hbm [shape: f32[4,128], index: 4, kind: output, shape index: {}]
  %s5 = sld [smem:[#allocation0]]
  $region26: #{forward.1} parent=0
    _
  %s7 = ssub.s32 1, %s5
  %s8 = scalar_select 0, %s7, %s5
  $region1: #{forward.1} parent=0
    #allocation2 [shape = 'u8[2048]{0}', space=vmem, size = 0x800, scoped, tag = 'output window, operand 0, single buffered']
    #allocation3 [shape = 's32[1]{0}', space=sflag, size = 0x4, scoped, tag = 'scoped memory for forward.1']
    %9 = vsyncpa [#allocation3], 0
    // Predicated region
    $region2: #{forward.1} parent=1 // pred_check
      _
    $region3: #{forward.1} parent=1 // pred_check_branch
      %11 = sbr.rel (0) target = $region5
    $region4: #{forward.1} parent=1 // pred_region
      _
    $region5: #{forward.1} parent=1 // pred_fallthru
      _
    // Predicated region
    $region6: #{forward.1} parent=1 // pred_check
      _
    $region7: #{forward.1} parent=1 // pred_check_branch
      %13 = sbr.rel (0) target = $region9
    $region8: #{forward.1} parent=1 // pred_region
      _
    $region9: #{forward.1} parent=1 // pred_fallthru
      _
    // Predicated region
    $region10: #{forward.1} parent=1 // pred_check
      _
    $region11: #{forward.1} parent=1 // pred_check_branch
      %15 = sbr.rel (0) target = $region13
    $region12: #{forward.1} parent=1 // pred_region
      _
    $region13: #{forward.1} parent=1 // pred_fallthru
      _
    // Predicated region
    $region14: #{forward.1} parent=1 // pred_check
      _
    $region15: #{forward.1} parent=1 // pred_check_branch
      %17 = sbr.rel (0) target = $region17
    $region16: #{forward.1} parent=1 // pred_region
      _
    $region17: #{forward.1} parent=1 // pred_fallthru
      _
    %v18 = vld [vmem:[%s3 + $0x3] sm:$0x1]
    %v19 = vld [vmem:[%s0] sm:$0xff]
    %v20 = vld [vmem:[%s0 + $0x8] sm:$0xff]
    %v21 = vld [vmem:[%s0 + $0x10] sm:$0xff]
    %v22 = vld [vmem:[%s0 + $0x18] sm:$0xff]
    %v23 = vld [vmem:[%s0 + $0x20] sm:$0xff]
    %v24 = vld [vmem:[%s1] sm:$0xff]
    %v25 = vld [vmem:[%s1 + $0x8] sm:$0xff]
    %v26 = vld [vmem:[%s1 + $0x10] sm:$0xff]
    %v27 = vld [vmem:[%s1 + $0x18] sm:$0xff]
    %v28 = vld [vmem:[%s1 + $0x20] sm:$0xff]
    %v29 = vld [vmem:[%s1 + $0x28] sm:$0xff]
    %v30 = vlaneseq
    %v31 = vshrl.u32 %v30, 7
    %v32 = vsub.s32 0, %v31
    %v33 = vrot.slane %v18, %v32
    %vm34 = vcmask 392192
    %v36 = vsel %vm34, %v19, 0
    %v39 = vsel %vm34, %v20, 0
    %v42 = vsel %vm34, %v21, 0
    %v45 = vsel %vm34, %v22, 0
    %v48 = vsel %vm34, %v23, 0
    %50 = vmatprep.subr.mxu0 0.0
    %51 = vmatpush1.msra.mxu0 0.0
    %52 = vmatprep.subr.mxu0 0.0
    %53 = vmatpush1.msra.mxu0 0.0
    %54 = vmatprep.subr.mxu0 0.0
    %55 = vmatpush1.msra.mxu0 0.0
    %56 = vmatprep.subr.mxu0 0.0
    %57 = vmatpush1.msra.mxu0 0.0
    %58 = vmatprep.subr.mxu0 0.0
    %59 = vmatpush1.msra.mxu0 0.0
    %60 = vmatprep.subr.mxu0 0.0
    %61 = vmatpush1.msra.mxu0 0.0
    %62 = vmatprep.subr.mxu0 0.0
    %63 = vmatpush1.msra.mxu0 0.0
    %64 = vmatprep.subr.mxu0 0.0
    %65 = vmatpush1.msra.mxu0 0.0
    %66 = vmatprep.subr.mxu0 0.0
    %67 = vmatpush1.msra.mxu0 0.0
    %68 = vmatprep.subr.mxu0 0.0
    %69 = vmatpush1.msra.mxu0 0.0
    %70 = vmatprep.subr.mxu0 0.0
    %71 = vmatpush1.msra.mxu0 %v29
    %72 = vmatprep.subr.mxu0 0.0
    %73 = vmatpush1.msra.mxu0 %v28
    %74 = vmatprep.subr.mxu0 0.0
    %75 = vmatpush1.msra.mxu0 %v27
    %76 = vmatprep.subr.mxu0 0.0
    %77 = vmatpush1.msra.mxu0 %v26
    %78 = vmatprep.subr.mxu0 0.0
    %79 = vmatpush1.msra.mxu0 %v25
    %80 = vmatprep.subr.mxu0 0.0
    %81 = vmatpush1.msra.mxu0 %v24
    %82 = vmatprep.subr.mxu0 0.0
    %83 = vmatpush2.msra.mxu0 0.0
    %84 = vmatprep.subr.mxu0 0.0
    %85 = vmatpush2.msra.mxu0 0.0
    %86 = vmatprep.subr.mxu0 0.0
    %87 = vmatpush2.msra.mxu0 0.0
    %88 = vmatprep.subr.mxu0 0.0
    %89 = vmatpush2.msra.mxu0 0.0
    %90 = vmatprep.subr.mxu0 0.0
    %91 = vmatpush2.msra.mxu0 0.0
    %92 = vmatprep.subr.mxu0 0.0
    %93 = vmatpush2.msra.mxu0 0.0
    %94 = vmatprep.subr.mxu0 0.0
    %95 = vmatpush2.msra.mxu0 0.0
    %96 = vmatprep.subr.mxu0 0.0
    %97 = vmatpush2.msra.mxu0 0.0
    %98 = vmatprep.subr.mxu0 0.0
    %99 = vmatpush2.msra.mxu0 0.0
    %100 = vmatprep.subr.mxu0 0.0
    %101 = vmatpush2.msra.mxu0 0.0
    %102 = vmatprep.subr.mxu0 0.0
    %103 = vmatpush2.msra.mxu0 0.0
    %104 = vmatprep.subr.mxu0 0.0
    %105 = vmatpush2.msra.mxu0 0.0
    %106 = vmatprep.subr.mxu0 0.0
    %107 = vmatpush2.msra.mxu0 0.0
    %108 = vmatprep.subr.mxu0 0.0
    %109 = vmatpush2.msra.mxu0 0.0
    %110 = vmatprep.subr.mxu0 0.0
    %111 = vmatpush2.msra.mxu0 0.0
    %112 = vmatprep.subr.mxu0 0.0
    %113 = vmatpush2.msra.mxu0 0.0
    %114 = vmatprep.mubr.f32.mxu0 0.0
    %115 = vmatmul.mubr.f32.gmra.mxu0 %v36
    %v116 = vpop.f32.mrf.mxu0
    %v117 = vadd.f32 %v33, %v116
    %v118 = vpop.f32.mrf.mxu0
    %119 = vmatprep.mubr.f32.mxu0 0.0
    %120 = vmatmul.mubr.f32.gmra.mxu0 %v39
    %v121 = vpop.f32.mrf.mxu0
    %v122 = vadd.f32 %v33, %v121
    %v123 = vpop.f32.mrf.mxu0
    %124 = vmatprep.mubr.f32.mxu0 0.0
    %125 = vmatmul.mubr.f32.gmra.mxu0 %v42
    %v126 = vpop.f32.mrf.mxu0
    %v127 = vadd.f32 %v33, %v126
    %v128 = vpop.f32.mrf.mxu0
    %129 = vmatprep.mubr.f32.mxu0 0.0
    %130 = vmatmul.mubr.f32.gmra.mxu0 %v45
    %v131 = vpop.f32.mrf.mxu0
    %v132 = vadd.f32 %v33, %v131
    %v133 = vpop.f32.mrf.mxu0
    %134 = vmatprep.mubr.f32.mxu0 0.0
    %135 = vmatmul.mubr.f32.gmra.mxu0 %v48
    %v136 = vpop.f32.mrf.mxu0
    %v137 = vadd.f32 %v33, %v136
    %v138 = vpop.f32.mrf.mxu0
    %139 = vdwg.mxu0
    %v140 = vmax.f32 %v117, 0.0
    %v141 = vmax.f32 %v122, 0.0
    %v142 = vmax.f32 %v127, 0.0
    %v143 = vmax.f32 %v132, 0.0
    %v144 = vmax.f32 %v137, 0.0
    %v145 = vld [vmem:[%s2] sm:$0xff]
    %v146 = vld [vmem:[%s2 + $0x8] sm:$0xff]
    %v147 = vld [vmem:[%s2 + $0x10] sm:$0xff]
    %v148 = vld [vmem:[%s2 + $0x18] sm:$0xff]
    %v149 = vld [vmem:[%s2 + $0x20] sm:$0xff]
    %v150 = vld [vmem:[%s2 + $0x28] sm:$0xff]
    %v151 = vld [vmem:[%s2 + $0x30] sm:$0xff]
    %v152 = vld [vmem:[%s2 + $0x38] sm:$0xff]
    %v153 = vld [vmem:[%s2 + $0x40] sm:$0xff]
    %v154 = vld [vmem:[%s2 + $0x48] sm:$0xff]
    %v155 = vld [vmem:[%s2 + $0x50] sm:$0xff]
    %v156 = vld [vmem:[%s2 + $0x58] sm:$0xff]
    %v157 = vld [vmem:[%s2 + $0x60] sm:$0xff]
    %v158 = vld [vmem:[%s2 + $0x68] sm:$0xff]
    %v159 = vld [vmem:[%s2 + $0x70] sm:$0xff]
    %v160 = vld [vmem:[%s2 + $0x78] sm:$0xff]
    %v161 = vld [vmem:[%s2 + $0x80] sm:$0xff]
    %v162 = vld [vmem:[%s2 + $0x88] sm:$0xff]
    %v163 = vld [vmem:[%s2 + $0x90] sm:$0xff]
    %v164 = vld [vmem:[%s2 + $0x98] sm:$0xff]
    %v165 = vld [vmem:[%s2 + $0xa0] sm:$0xff]
    %v166 = vld [vmem:[%s2 + $0xa8] sm:$0xff]
    %v167 = vld [vmem:[%s2 + $0xb0] sm:$0xff]
    %v168 = vld [vmem:[%s2 + $0xb8] sm:$0xff]
    %v169 = vld [vmem:[%s3] sm:$0x1]
    %v170 = vld [vmem:[%s3 + $0x1] sm:$0x1]
    %v171 = vld [vmem:[%s3 + $0x2] sm:$0x1]
    %v172 = vlaneseq
    %v173 = vshrl.u32 %v172, 7
    %v174 = vsub.s32 0, %v173
    %v175 = vrot.slane %v169, %v174
    %vm176 = vcmask 261120
    %v178 = vsel %vm176, %v140, 0
    %v181 = vsel %vm176, %v141, 0
    %v184 = vsel %vm176, %v142, 0
    %v187 = vsel %vm176, %v143, 0
    %v190 = vsel %vm176, %v144, 0
    %192 = vmatprep.subr.mxu0 0.0
    %193 = vmatpush1.msra.mxu0 0.0
    %194 = vmatprep.subr.mxu0 0.0
    %195 = vmatpush1.msra.mxu0 0.0
    %196 = vmatprep.subr.mxu0 0.0
    %197 = vmatpush1.msra.mxu0 0.0
    %198 = vmatprep.subr.mxu0 0.0
    %199 = vmatpush1.msra.mxu0 0.0
    %200 = vmatprep.subr.mxu0 0.0
    %201 = vmatpush1.msra.mxu0 0.0
    %202 = vmatprep.subr.mxu0 0.0
    %203 = vmatpush1.msra.mxu0 0.0
    %204 = vmatprep.subr.mxu0 0.0
    %205 = vmatpush1.msra.mxu0 0.0
    %206 = vmatprep.subr.mxu0 0.0
    %207 = vmatpush1.msra.mxu0 0.0
    %208 = vmatprep.subr.mxu0 0.0
    %209 = vmatpush1.msra.mxu0 0.0
    %210 = vmatprep.subr.mxu0 0.0
    %211 = vmatpush1.msra.mxu0 0.0
    %212 = vmatprep.subr.mxu0 0.0
    %213 = vmatpush1.msra.mxu0 0.0
    %214 = vmatprep.subr.mxu0 0.0
    %215 = vmatpush1.msra.mxu0 0.0
    %216 = vmatprep.subr.mxu0 0.0
    %217 = vmatpush1.msra.mxu0 %v148
    %218 = vmatprep.subr.mxu0 0.0
    %219 = vmatpush1.msra.mxu0 %v147
    %220 = vmatprep.subr.mxu0 0.0
    %221 = vmatpush1.msra.mxu0 %v146
    %222 = vmatprep.subr.mxu0 0.0
    %223 = vmatpush1.msra.mxu0 %v145
    %224 = vmatprep.subr.mxu0 0.0
    %225 = vmatpush2.msra.mxu0 0.0
    %226 = vmatprep.subr.mxu0 0.0
    %227 = vmatpush2.msra.mxu0 0.0
    %228 = vmatprep.subr.mxu0 0.0
    %229 = vmatpush2.msra.mxu0 0.0
    %230 = vmatprep.subr.mxu0 0.0
    %231 = vmatpush2.msra.mxu0 0.0
    %232 = vmatprep.subr.mxu0 0.0
    %233 = vmatpush2.msra.mxu0 0.0
    %234 = vmatprep.subr.mxu0 0.0
    %235 = vmatpush2.msra.mxu0 0.0
    %236 = vmatprep.subr.mxu0 0.0
    %237 = vmatpush2.msra.mxu0 0.0
    %238 = vmatprep.subr.mxu0 0.0
    %239 = vmatpush2.msra.mxu0 0.0
    %240 = vmatprep.subr.mxu0 0.0
    %241 = vmatpush2.msra.mxu0 0.0
    %242 = vmatprep.subr.mxu0 0.0
    %243 = vmatpush2.msra.mxu0 0.0
    %244 = vmatprep.subr.mxu0 0.0
    %245 = vmatpush2.msra.mxu0 0.0
    %246 = vmatprep.subr.mxu0 0.0
    %247 = vmatpush2.msra.mxu0 0.0
    %248 = vmatprep.subr.mxu0 0.0
    %249 = vmatpush2.msra.mxu0 0.0
    %250 = vmatprep.subr.mxu0 0.0
    %251 = vmatpush2.msra.mxu0 0.0
    %252 = vmatprep.subr.mxu0 0.0
    %253 = vmatpush2.msra.mxu0 0.0
    %254 = vmatprep.subr.mxu0 0.0
    %255 = vmatpush2.msra.mxu0 0.0
    %256 = vmatprep.mubr.f32.mxu0 0.0
    %257 = vmatmul.mubr.f32.gmra.mxu0 %v178
    %v258 = vpop.f32.mrf.mxu0
    %v259 = vadd.f32 %v175, %v258
    %v260 = vpop.f32.mrf.mxu0
    %261 = vmatprep.mubr.f32.mxu0 0.0
    %262 = vmatmul.mubr.f32.gmra.mxu0 %v181
    %v263 = vpop.f32.mrf.mxu0
    %v264 = vadd.f32 %v175, %v263
    %v265 = vpop.f32.mrf.mxu0
    %266 = vmatprep.mubr.f32.mxu0 0.0
    %267 = vmatmul.mubr.f32.gmra.mxu0 %v184
    %v268 = vpop.f32.mrf.mxu0
    %v269 = vadd.f32 %v175, %v268
    %v270 = vpop.f32.mrf.mxu0
    %271 = vmatprep.mubr.f32.mxu0 0.0
    %272 = vmatmul.mubr.f32.gmra.mxu0 %v187
    %v273 = vpop.f32.mrf.mxu0
    %v274 = vadd.f32 %v175, %v273
    %v275 = vpop.f32.mrf.mxu0
    %276 = vmatprep.mubr.f32.mxu0 0.0
    %277 = vmatmul.mubr.f32.gmra.mxu0 %v190
    %v278 = vpop.f32.mrf.mxu0
    %v279 = vadd.f32 %v175, %v278
    %v280 = vpop.f32.mrf.mxu0
    %281 = vdwg.mxu0
    %282 = vmatprep.subr.mxu0 0.0
    %283 = vmatpush1.msra.mxu0 0.0
    %284 = vmatprep.subr.mxu0 0.0
    %285 = vmatpush1.msra.mxu0 0.0
    %286 = vmatprep.subr.mxu0 0.0
    %287 = vmatpush1.msra.mxu0 0.0
    %288 = vmatprep.subr.mxu0 0.0
    %289 = vmatpush1.msra.mxu0 0.0
    %290 = vmatprep.subr.mxu0 0.0
    %291 = vmatpush1.msra.mxu0 0.0
    %292 = vmatprep.subr.mxu0 0.0
    %293 = vmatpush1.msra.mxu0 0.0
    %294 = vmatprep.subr.mxu0 0.0
    %295 = vmatpush1.msra.mxu0 0.0
    %296 = vmatprep.subr.mxu0 0.0
    %297 = vmatpush1.msra.mxu0 0.0
    %298 = vmatprep.subr.mxu0 0.0
    %299 = vmatpush1.msra.mxu0 0.0
    %300 = vmatprep.subr.mxu0 0.0
    %301 = vmatpush1.msra.mxu0 0.0
    %302 = vmatprep.subr.mxu0 0.0
    %303 = vmatpush1.msra.mxu0 0.0
    %304 = vmatprep.subr.mxu0 0.0
    %305 = vmatpush1.msra.mxu0 0.0
    %306 = vmatprep.subr.mxu0 0.0
    %307 = vmatpush1.msra.mxu0 %v152
    %308 = vmatprep.subr.mxu0 0.0
    %309 = vmatpush1.msra.mxu0 %v151
    %310 = vmatprep.subr.mxu0 0.0
    %311 = vmatpush1.msra.mxu0 %v150
    %312 = vmatprep.subr.mxu0 0.0
    %313 = vmatpush1.msra.mxu0 %v149
    %314 = vmatprep.subr.mxu0 0.0
    %315 = vmatpush2.msra.mxu0 0.0
    %316 = vmatprep.subr.mxu0 0.0
    %317 = vmatpush2.msra.mxu0 0.0
    %318 = vmatprep.subr.mxu0 0.0
    %319 = vmatpush2.msra.mxu0 0.0
    %320 = vmatprep.subr.mxu0 0.0
    %321 = vmatpush2.msra.mxu0 0.0
    %322 = vmatprep.subr.mxu0 0.0
    %323 = vmatpush2.msra.mxu0 0.0
    %324 = vmatprep.subr.mxu0 0.0
    %325 = vmatpush2.msra.mxu0 0.0
    %326 = vmatprep.subr.mxu0 0.0
    %327 = vmatpush2.msra.mxu0 0.0
    %328 = vmatprep.subr.mxu0 0.0
    %329 = vmatpush2.msra.mxu0 0.0
    %330 = vmatprep.subr.mxu0 0.0
    %331 = vmatpush2.msra.mxu0 0.0
    %332 = vmatprep.subr.mxu0 0.0
    %333 = vmatpush2.msra.mxu0 0.0
    %334 = vmatprep.subr.mxu0 0.0
    %335 = vmatpush2.msra.mxu0 0.0
    %336 = vmatprep.subr.mxu0 0.0
    %337 = vmatpush2.msra.mxu0 0.0
    %338 = vmatprep.subr.mxu0 0.0
    %339 = vmatpush2.msra.mxu0 0.0
    %340 = vmatprep.subr.mxu0 0.0
    %341 = vmatpush2.msra.mxu0 0.0
    %342 = vmatprep.subr.mxu0 0.0
    %343 = vmatpush2.msra.mxu0 0.0
    %344 = vmatprep.subr.mxu0 0.0
    %345 = vmatpush2.msra.mxu0 0.0
    %346 = vmatprep.mubr.f32.mxu0 0.0
    %347 = vmatmul.mubr.f32.gmra.mxu0 %v178
    %v348 = vpop.f32.mrf.mxu0
    %v349 = vadd.f32 0.0, %v348
    %v350 = vpop.f32.mrf.mxu0
    %351 = vmatprep.mubr.f32.mxu0 0.0
    %352 = vmatmul.mubr.f32.gmra.mxu0 %v181
    %v353 = vpop.f32.mrf.mxu0
    %v354 = vadd.f32 0.0, %v353
    %v355 = vpop.f32.mrf.mxu0
    %356 = vmatprep.mubr.f32.mxu0 0.0
    %357 = vmatmul.mubr.f32.gmra.mxu0 %v184
    %v358 = vpop.f32.mrf.mxu0
    %v359 = vadd.f32 0.0, %v358
    %v360 = vpop.f32.mrf.mxu0
    %361 = vmatprep.mubr.f32.mxu0 0.0
    %362 = vmatmul.mubr.f32.gmra.mxu0 %v187
    %v363 = vpop.f32.mrf.mxu0
    %v364 = vadd.f32 0.0, %v363
    %v365 = vpop.f32.mrf.mxu0
    %366 = vmatprep.mubr.f32.mxu0 0.0
    %367 = vmatmul.mubr.f32.gmra.mxu0 %v190
    %v368 = vpop.f32.mrf.mxu0
    %v369 = vadd.f32 0.0, %v368
    %v370 = vpop.f32.mrf.mxu0
    %371 = vdwg.mxu0
    %v372 = vlaneseq
    %v373 = vshrl.u32 %v372, 7
    %v374 = vsub.s32 0, %v373
    %v375 = vrot.slane %v170, %v374
    %376 = vmatprep.subr.mxu0 0.0
    %377 = vmatpush1.msra.mxu0 0.0
    %378 = vmatprep.subr.mxu0 0.0
    %379 = vmatpush1.msra.mxu0 0.0
    %380 = vmatprep.subr.mxu0 0.0
    %381 = vmatpush1.msra.mxu0 0.0
    %382 = vmatprep.subr.mxu0 0.0
    %383 = vmatpush1.msra.mxu0 0.0
    %384 = vmatprep.subr.mxu0 0.0
    %385 = vmatpush1.msra.mxu0 0.0
    %386 = vmatprep.subr.mxu0 0.0
    %387 = vmatpush1.msra.mxu0 0.0
    %388 = vmatprep.subr.mxu0 0.0
    %389 = vmatpush1.msra.mxu0 0.0
    %390 = vmatprep.subr.mxu0 0.0
    %391 = vmatpush1.msra.mxu0 0.0
    %392 = vmatprep.subr.mxu0 0.0
    %393 = vmatpush1.msra.mxu0 0.0
    %394 = vmatprep.subr.mxu0 0.0
    %395 = vmatpush1.msra.mxu0 0.0
    %396 = vmatprep.subr.mxu0 0.0
    %397 = vmatpush1.msra.mxu0 0.0
    %398 = vmatprep.subr.mxu0 0.0
    %399 = vmatpush1.msra.mxu0 0.0
    %400 = vmatprep.subr.mxu0 0.0
    %401 = vmatpush1.msra.mxu0 %v160
    %402 = vmatprep.subr.mxu0 0.0
    %403 = vmatpush1.msra.mxu0 %v159
    %404 = vmatprep.subr.mxu0 0.0
    %405 = vmatpush1.msra.mxu0 %v158
    %406 = vmatprep.subr.mxu0 0.0
    %407 = vmatpush1.msra.mxu0 %v157
    %408 = vmatprep.subr.mxu0 0.0
    %409 = vmatpush2.msra.mxu0 0.0
    %410 = vmatprep.subr.mxu0 0.0
    %411 = vmatpush2.msra.mxu0 0.0
    %412 = vmatprep.subr.mxu0 0.0
    %413 = vmatpush2.msra.mxu0 0.0
    %414 = vmatprep.subr.mxu0 0.0
    %415 = vmatpush2.msra.mxu0 0.0
    %416 = vmatprep.subr.mxu0 0.0
    %417 = vmatpush2.msra.mxu0 0.0
    %418 = vmatprep.subr.mxu0 0.0
    %419 = vmatpush2.msra.mxu0 0.0
    %420 = vmatprep.subr.mxu0 0.0
    %421 = vmatpush2.msra.mxu0 0.0
    %422 = vmatprep.subr.mxu0 0.0
    %423 = vmatpush2.msra.mxu0 0.0
    %424 = vmatprep.subr.mxu0 0.0
    %425 = vmatpush2.msra.mxu0 0.0
    %426 = vmatprep.subr.mxu0 0.0
    %427 = vmatpush2.msra.mxu0 0.0
    %428 = vmatprep.subr.mxu0 0.0
    %429 = vmatpush2.msra.mxu0 0.0
    %430 = vmatprep.subr.mxu0 0.0
    %431 = vmatpush2.msra.mxu0 0.0
    %432 = vmatprep.subr.mxu0 0.0
    %433 = vmatpush2.msra.mxu0 0.0
    %434 = vmatprep.subr.mxu0 0.0
    %435 = vmatpush2.msra.mxu0 0.0
    %436 = vmatprep.subr.mxu0 0.0
    %437 = vmatpush2.msra.mxu0 0.0
    %438 = vmatprep.subr.mxu0 0.0
    %439 = vmatpush2.msra.mxu0 0.0
    %440 = vmatprep.mubr.f32.mxu0 0.0
    %441 = vmatmul.mubr.f32.gmra.mxu0 %v178
    %v442 = vpop.f32.mrf.mxu0
    %v443 = vadd.f32 %v375, %v442
    %v444 = vpop.f32.mrf.mxu0
    %445 = vmatprep.mubr.f32.mxu0 0.0
    %446 = vmatmul.mubr.f32.gmra.mxu0 %v181
    %v447 = vpop.f32.mrf.mxu0
    %v448 = vadd.f32 %v375, %v447
    %v449 = vpop.f32.mrf.mxu0
    %450 = vmatprep.mubr.f32.mxu0 0.0
    %451 = vmatmul.mubr.f32.gmra.mxu0 %v184
    %v452 = vpop.f32.mrf.mxu0
    %v453 = vadd.f32 %v375, %v452
    %v454 = vpop.f32.mrf.mxu0
    %455 = vmatprep.mubr.f32.mxu0 0.0
    %456 = vmatmul.mubr.f32.gmra.mxu0 %v187
    %v457 = vpop.f32.mrf.mxu0
    %v458 = vadd.f32 %v375, %v457
    %v459 = vpop.f32.mrf.mxu0
    %460 = vmatprep.mubr.f32.mxu0 0.0
    %461 = vmatmul.mubr.f32.gmra.mxu0 %v190
    %v462 = vpop.f32.mrf.mxu0
    %v463 = vadd.f32 %v375, %v462
    %v464 = vpop.f32.mrf.mxu0
    %465 = vdwg.mxu0
    %vm468 = vcmask 1041408
    %v469 = vrot.slane %v364, 6
    %v470 = vrot.slane %v369, 6
    %v471 = vsel %vm468, %v469, %v470
    %v474 = vadd.f32 %v259, %v471
    %v475 = vadd.f32 %v264, %v470
    %vm477 = vcmask 1045504
    %v478 = vrot.slane %v359, 2
    %v479 = vrot.slane %v364, 2
    %v480 = vsel %vm477, %v478, %v479
    %v483 = vadd.f32 %v264, %v480
    %v484 = vadd.f32 %v269, %v479
    %v486 = vrot.slane %v354, 6
    %v487 = vrot.slane %v359, 6
    %v488 = vsel %vm468, %v486, %v487
    %v491 = vadd.f32 %v269, %v486
    %v492 = vadd.f32 %v274, %v488
    %v494 = vrot.slane %v349, 2
    %v495 = vrot.slane %v354, 2
    %v496 = vsel %vm477, %v494, %v495
    %v499 = vadd.f32 %v274, %v494
    %v500 = vadd.f32 %v279, %v496
    %v502 = vsel %vm176, 0.0, 0
    %504 = vmatprep.subr.mxu0 0.0
    %505 = vmatpush1.msra.mxu0 0.0
    %506 = vmatprep.subr.mxu0 0.0
    %507 = vmatpush1.msra.mxu0 0.0
    %508 = vmatprep.subr.mxu0 0.0
    %509 = vmatpush1.msra.mxu0 0.0
    %510 = vmatprep.subr.mxu0 0.0
    %511 = vmatpush1.msra.mxu0 0.0
    %512 = vmatprep.subr.mxu0 0.0
    %513 = vmatpush1.msra.mxu0 0.0
    %514 = vmatprep.subr.mxu0 0.0
    %515 = vmatpush1.msra.mxu0 0.0
    %516 = vmatprep.subr.mxu0 0.0
    %517 = vmatpush1.msra.mxu0 0.0
    %518 = vmatprep.subr.mxu0 0.0
    %519 = vmatpush1.msra.mxu0 0.0
    %520 = vmatprep.subr.mxu0 0.0
    %521 = vmatpush1.msra.mxu0 0.0
    %522 = vmatprep.subr.mxu0 0.0
    %523 = vmatpush1.msra.mxu0 0.0
    %524 = vmatprep.subr.mxu0 0.0
    %525 = vmatpush1.msra.mxu0 0.0
    %526 = vmatprep.subr.mxu0 0.0
    %527 = vmatpush1.msra.mxu0 0.0
    %528 = vmatprep.subr.mxu0 0.0
    %529 = vmatpush1.msra.mxu0 %v156
    %530 = vmatprep.subr.mxu0 0.0
    %531 = vmatpush1.msra.mxu0 %v155
    %532 = vmatprep.subr.mxu0 0.0
    %533 = vmatpush1.msra.mxu0 %v154
    %534 = vmatprep.subr.mxu0 0.0
    %535 = vmatpush1.msra.mxu0 %v153
    %536 = vmatprep.subr.mxu0 0.0
    %537 = vmatpush2.msra.mxu0 0.0
    %538 = vmatprep.subr.mxu0 0.0
    %539 = vmatpush2.msra.mxu0 0.0
    %540 = vmatprep.subr.mxu0 0.0
    %541 = vmatpush2.msra.mxu0 0.0
    %542 = vmatprep.subr.mxu0 0.0
    %543 = vmatpush2.msra.mxu0 0.0
    %544 = vmatprep.subr.mxu0 0.0
    %545 = vmatpush2.msra.mxu0 0.0
    %546 = vmatprep.subr.mxu0 0.0
    %547 = vmatpush2.msra.mxu0 0.0
    %548 = vmatprep.subr.mxu0 0.0
    %549 = vmatpush2.msra.mxu0 0.0
    %550 = vmatprep.subr.mxu0 0.0
    %551 = vmatpush2.msra.mxu0 0.0
    %552 = vmatprep.subr.mxu0 0.0
    %553 = vmatpush2.msra.mxu0 0.0
    %554 = vmatprep.subr.mxu0 0.0
    %555 = vmatpush2.msra.mxu0 0.0
    %556 = vmatprep.subr.mxu0 0.0
    %557 = vmatpush2.msra.mxu0 0.0
    %558 = vmatprep.subr.mxu0 0.0
    %559 = vmatpush2.msra.mxu0 0.0
    %560 = vmatprep.subr.mxu0 0.0
    %561 = vmatpush2.msra.mxu0 0.0
    %562 = vmatprep.subr.mxu0 0.0
    %563 = vmatpush2.msra.mxu0 0.0
    %564 = vmatprep.subr.mxu0 0.0
    %565 = vmatpush2.msra.mxu0 0.0
    %566 = vmatprep.subr.mxu0 0.0
    %567 = vmatpush2.msra.mxu0 0.0
    %568 = vmatprep.mubr.f32.mxu0 0.0
    %569 = vmatmul.mubr.f32.gmra.mxu0 %v502
    %v570 = vpop.f32.mrf.mxu0
    %v571 = vadd.f32 0.0, %v570
    %v572 = vpop.f32.mrf.mxu0
    %573 = vmatprep.mubr.f32.mxu0 0.0
    %574 = vmatmul.mubr.f32.gmra.mxu0 %v502
    %v575 = vpop.f32.mrf.mxu0
    %v576 = vadd.f32 0.0, %v575
    %v577 = vpop.f32.mrf.mxu0
    %578 = vdwg.mxu0
    %v579 = vadd.f32 %v474, %v571
    %v580 = vadd.f32 %v475, %v576
    %v581 = vxor.u32 %v579, 2147483648
    %v582 = vxor.u32 %v580, 2147483648
    %v583 = vmul.f32 %v581, 1.442695
    %v584 = vpow.pop %v583
    %v585 = vmul.f32 %v582, 1.442695
    %v586 = vpow.pop %v585
    %v587 = vadd.f32 %v584, 1.0
    %v588 = vadd.f32 %v586, 1.0
    %v589 = vrcp.pop %v587
    %v590 = vmul.f32 1.0, %v589
    %v591 = vrcp.pop %v588
    %v592 = vmul.f32 1.0, %v591
    %v593 = vtanh.pop %v579
    %v594 = vtanh.pop %v580
    %v595 = vmul.f32 %v590, 0.0
    %v596 = vmul.f32 %v592, 0.0
    %599 = vrot.lane.b32.xlu0 %v593, 32
    %v600 = vpop.permute.xlu0 %599
    %601 = vrot.lane.b32.xlu0 %v594, 32
    %v602 = vpop.permute.xlu0 %601
    %v605 = vmul.f32 %v590, %v600
    %v606 = vmul.f32 %v592, %v602
    %609 = vrot.lane.b32.xlu0 %v605, 32
    %v610 = vpop.permute.xlu0 %609
    %611 = vrot.lane.b32.xlu0 %v606, 32
    %v612 = vpop.permute.xlu0 %611
    %v615 = vadd.f32 %v595, %v610
    %v616 = vadd.f32 %v596, %v612
    %v617 = vtanh.pop %v615
    %v618 = vtanh.pop %v616
    %621 = vrot.lane.b32.xlu0 %v617, 32
    %v622 = vpop.permute.xlu0 %621
    %623 = vrot.lane.b32.xlu0 %v618, 32
    %v624 = vpop.permute.xlu0 %623
    %v627 = vmul.f32 %v590, %v622
    %v628 = vmul.f32 %v592, %v624
    %631 = vrot.lane.b32.xlu0 %v627, 64
    %v632 = vpop.permute.xlu0 %631
    %633 = vrot.lane.b32.xlu0 %v628, 64
    %v634 = vpop.permute.xlu0 %633
    %v635 = vsel %vm176, %v632, 0
    %v637 = vsel %vm176, %v634, 0
    %639 = vmatprep.subr.mxu0 0.0
    %640 = vmatpush1.msra.mxu0 0.0
    %641 = vmatprep.subr.mxu0 0.0
    %642 = vmatpush1.msra.mxu0 0.0
    %643 = vmatprep.subr.mxu0 0.0
    %644 = vmatpush1.msra.mxu0 0.0
    %645 = vmatprep.subr.mxu0 0.0
    %646 = vmatpush1.msra.mxu0 0.0
    %647 = vmatprep.subr.mxu0 0.0
    %648 = vmatpush1.msra.mxu0 0.0
    %649 = vmatprep.subr.mxu0 0.0
    %650 = vmatpush1.msra.mxu0 0.0
    %651 = vmatprep.subr.mxu0 0.0
    %652 = vmatpush1.msra.mxu0 0.0
    %653 = vmatprep.subr.mxu0 0.0
    %654 = vmatpush1.msra.mxu0 0.0
    %655 = vmatprep.subr.mxu0 0.0
    %656 = vmatpush1.msra.mxu0 0.0
    %657 = vmatprep.subr.mxu0 0.0
    %658 = vmatpush1.msra.mxu0 0.0
    %659 = vmatprep.subr.mxu0 0.0
    %660 = vmatpush1.msra.mxu0 0.0
    %661 = vmatprep.subr.mxu0 0.0
    %662 = vmatpush1.msra.mxu0 0.0
    %663 = vmatprep.subr.mxu0 0.0
    %664 = vmatpush1.msra.mxu0 %v156
    %665 = vmatprep.subr.mxu0 0.0
    %666 = vmatpush1.msra.mxu0 %v155
    %667 = vmatprep.subr.mxu0 0.0
    %668 = vmatpush1.msra.mxu0 %v154
    %669 = vmatprep.subr.mxu0 0.0
    %670 = vmatpush1.msra.mxu0 %v153
    %671 = vmatprep.subr.mxu0 0.0
    %672 = vmatpush2.msra.mxu0 0.0
    %673 = vmatprep.subr.mxu0 0.0
    %674 = vmatpush2.msra.mxu0 0.0
    %675 = vmatprep.subr.mxu0 0.0
    %676 = vmatpush2.msra.mxu0 0.0
    %677 = vmatprep.subr.mxu0 0.0
    %678 = vmatpush2.msra.mxu0 0.0
    %679 = vmatprep.subr.mxu0 0.0
    %680 = vmatpush2.msra.mxu0 0.0
    %681 = vmatprep.subr.mxu0 0.0
    %682 = vmatpush2.msra.mxu0 0.0
    %683 = vmatprep.subr.mxu0 0.0
    %684 = vmatpush2.msra.mxu0 0.0
    %685 = vmatprep.subr.mxu0 0.0
    %686 = vmatpush2.msra.mxu0 0.0
    %687 = vmatprep.subr.mxu0 0.0
    %688 = vmatpush2.msra.mxu0 0.0
    %689 = vmatprep.subr.mxu0 0.0
    %690 = vmatpush2.msra.mxu0 0.0
    %691 = vmatprep.subr.mxu0 0.0
    %692 = vmatpush2.msra.mxu0 0.0
    %693 = vmatprep.subr.mxu0 0.0
    %694 = vmatpush2.msra.mxu0 0.0
    %695 = vmatprep.subr.mxu0 0.0
    %696 = vmatpush2.msra.mxu0 0.0
    %697 = vmatprep.subr.mxu0 0.0
    %698 = vmatpush2.msra.mxu0 0.0
    %699 = vmatprep.subr.mxu0 0.0
    %700 = vmatpush2.msra.mxu0 0.0
    %701 = vmatprep.subr.mxu0 0.0
    %702 = vmatpush2.msra.mxu0 0.0
    %703 = vmatprep.mubr.f32.mxu0 0.0
    %704 = vmatmul.mubr.f32.gmra.mxu0 %v635
    %v705 = vpop.f32.mrf.mxu0
    %v706 = vadd.f32 0.0, %v705
    %v707 = vpop.f32.mrf.mxu0
    %708 = vmatprep.mubr.f32.mxu0 0.0
    %709 = vmatmul.mubr.f32.gmra.mxu0 %v637
    %v710 = vpop.f32.mrf.mxu0
    %v711 = vadd.f32 0.0, %v710
    %v712 = vpop.f32.mrf.mxu0
    %713 = vdwg.mxu0
    %v716 = vrot.slane %v706, 6
    %v717 = vrot.slane %v711, 6
    %v718 = vsel %vm468, %v716, %v717
    %v721 = vadd.f32 %v483, %v716
    %v722 = vadd.f32 %v484, %v718
    %v723 = vxor.u32 %v721, 2147483648
    %v724 = vxor.u32 %v722, 2147483648
    %v725 = vmul.f32 %v723, 1.442695
    %v726 = vpow.pop %v725
    %v727 = vmul.f32 %v724, 1.442695
    %v728 = vpow.pop %v727
    %v729 = vadd.f32 %v726, 1.0
    %v730 = vadd.f32 %v728, 1.0
    %v731 = vrcp.pop %v729
    %v732 = vmul.f32 1.0, %v731
    %v733 = vrcp.pop %v730
    %v734 = vmul.f32 1.0, %v733
    %v735 = vtanh.pop %v721
    %v736 = vtanh.pop %v722
    %v739 = vrot.slane %v615, 6
    %v740 = vrot.slane %v616, 6
    %v741 = vsel %vm468, %v739, %v740
    %v744 = vmul.f32 %v732, %v739
    %v745 = vmul.f32 %v734, %v741
    %748 = vrot.lane.b32.xlu0 %v735, 32
    %v749 = vpop.permute.xlu0 %748
    %750 = vrot.lane.b32.xlu0 %v736, 32
    %v751 = vpop.permute.xlu0 %750
    %v754 = vmul.f32 %v732, %v749
    %v755 = vmul.f32 %v734, %v751
    %758 = vrot.lane.b32.xlu0 %v754, 32
    %v759 = vpop.permute.xlu0 %758
    %760 = vrot.lane.b32.xlu0 %v755, 32
    %v761 = vpop.permute.xlu0 %760
    %v764 = vadd.f32 %v744, %v759
    %v765 = vadd.f32 %v745, %v761
    %v766 = vtanh.pop %v764
    %v767 = vtanh.pop %v765
    %770 = vrot.lane.b32.xlu0 %v766, 32
    %v771 = vpop.permute.xlu0 %770
    %772 = vrot.lane.b32.xlu0 %v767, 32
    %v773 = vpop.permute.xlu0 %772
    %v776 = vmul.f32 %v732, %v771
    %v777 = vmul.f32 %v734, %v773
    %v780 = vrot.slane %v776, 2
    %v781 = vrot.slane %v777, 2
    %v782 = vsel %vm477, %v780, %v781
    %783 = vrot.lane.b32.xlu0 %v782, 64
    %v784 = vpop.permute.xlu0 %783
    %785 = vrot.lane.b32.xlu0 %v781, 64
    %v786 = vpop.permute.xlu0 %785
    %v787 = vsel %vm176, %v784, 0
    %v789 = vsel %vm176, %v786, 0
    %791 = vmatprep.subr.mxu0 0.0
    %792 = vmatpush1.msra.mxu0 0.0
    %793 = vmatprep.subr.mxu0 0.0
    %794 = vmatpush1.msra.mxu0 0.0
    %795 = vmatprep.subr.mxu0 0.0
    %796 = vmatpush1.msra.mxu0 0.0
    %797 = vmatprep.subr.mxu0 0.0
    %798 = vmatpush1.msra.mxu0 0.0
    %799 = vmatprep.subr.mxu0 0.0
    %800 = vmatpush1.msra.mxu0 0.0
    %801 = vmatprep.subr.mxu0 0.0
    %802 = vmatpush1.msra.mxu0 0.0
    %803 = vmatprep.subr.mxu0 0.0
    %804 = vmatpush1.msra.mxu0 0.0
    %805 = vmatprep.subr.mxu0 0.0
    %806 = vmatpush1.msra.mxu0 0.0
    %807 = vmatprep.subr.mxu0 0.0
    %808 = vmatpush1.msra.mxu0 0.0
    %809 = vmatprep.subr.mxu0 0.0
    %810 = vmatpush1.msra.mxu0 0.0
    %811 = vmatprep.subr.mxu0 0.0
    %812 = vmatpush1.msra.mxu0 0.0
    %813 = vmatprep.subr.mxu0 0.0
    %814 = vmatpush1.msra.mxu0 0.0
    %815 = vmatprep.subr.mxu0 0.0
    %816 = vmatpush1.msra.mxu0 %v156
    %817 = vmatprep.subr.mxu0 0.0
    %818 = vmatpush1.msra.mxu0 %v155
    %819 = vmatprep.subr.mxu0 0.0
    %820 = vmatpush1.msra.mxu0 %v154
    %821 = vmatprep.subr.mxu0 0.0
    %822 = vmatpush1.msra.mxu0 %v153
    %823 = vmatprep.subr.mxu0 0.0
    %824 = vmatpush2.msra.mxu0 0.0
    %825 = vmatprep.subr.mxu0 0.0
    %826 = vmatpush2.msra.mxu0 0.0
    %827 = vmatprep.subr.mxu0 0.0
    %828 = vmatpush2.msra.mxu0 0.0
    %829 = vmatprep.subr.mxu0 0.0
    %830 = vmatpush2.msra.mxu0 0.0
    %831 = vmatprep.subr.mxu0 0.0
    %832 = vmatpush2.msra.mxu0 0.0
    %833 = vmatprep.subr.mxu0 0.0
    %834 = vmatpush2.msra.mxu0 0.0
    %835 = vmatprep.subr.mxu0 0.0
    %836 = vmatpush2.msra.mxu0 0.0
    %837 = vmatprep.subr.mxu0 0.0
    %838 = vmatpush2.msra.mxu0 0.0
    %839 = vmatprep.subr.mxu0 0.0
    %840 = vmatpush2.msra.mxu0 0.0
    %841 = vmatprep.subr.mxu0 0.0
    %842 = vmatpush2.msra.mxu0 0.0
    %843 = vmatprep.subr.mxu0 0.0
    %844 = vmatpush2.msra.mxu0 0.0
    %845 = vmatprep.subr.mxu0 0.0
    %846 = vmatpush2.msra.mxu0 0.0
    %847 = vmatprep.subr.mxu0 0.0
    %848 = vmatpush2.msra.mxu0 0.0
    %849 = vmatprep.subr.mxu0 0.0
    %850 = vmatpush2.msra.mxu0 0.0
    %851 = vmatprep.subr.mxu0 0.0
    %852 = vmatpush2.msra.mxu0 0.0
    %853 = vmatprep.subr.mxu0 0.0
    %854 = vmatpush2.msra.mxu0 0.0
    %855 = vmatprep.mubr.f32.mxu0 0.0
    %856 = vmatmul.mubr.f32.gmra.mxu0 %v787
    %v857 = vpop.f32.mrf.mxu0
    %v858 = vadd.f32 0.0, %v857
    %v859 = vpop.f32.mrf.mxu0
    %860 = vmatprep.mubr.f32.mxu0 0.0
    %861 = vmatmul.mubr.f32.gmra.mxu0 %v789
    %v862 = vpop.f32.mrf.mxu0
    %v863 = vadd.f32 0.0, %v862
    %v864 = vpop.f32.mrf.mxu0
    %865 = vdwg.mxu0
    %vm868 = vcmask 1043456
    %v869 = vrot.slane %v858, 4
    %v870 = vrot.slane %v863, 4
    %v871 = vsel %vm868, %v869, %v870
    %v874 = vadd.f32 %v491, %v869
    %v875 = vadd.f32 %v492, %v871
    %v876 = vxor.u32 %v874, 2147483648
    %v877 = vxor.u32 %v875, 2147483648
    %v878 = vmul.f32 %v876, 1.442695
    %v879 = vpow.pop %v878
    %v880 = vmul.f32 %v877, 1.442695
    %v881 = vpow.pop %v880
    %v882 = vadd.f32 %v879, 1.0
    %v883 = vadd.f32 %v881, 1.0
    %v884 = vrcp.pop %v882
    %v885 = vmul.f32 1.0, %v884
    %v886 = vrcp.pop %v883
    %v887 = vmul.f32 1.0, %v886
    %v888 = vtanh.pop %v874
    %v889 = vtanh.pop %v875
    %v892 = vrot.slane %v764, 6
    %v893 = vrot.slane %v765, 6
    %v894 = vsel %vm468, %v892, %v893
    %v897 = vmul.f32 %v885, %v892
    %v898 = vmul.f32 %v887, %v894
    %901 = vrot.lane.b32.xlu0 %v888, 32
    %v902 = vpop.permute.xlu0 %901
    %903 = vrot.lane.b32.xlu0 %v889, 32
    %v904 = vpop.permute.xlu0 %903
    %v907 = vmul.f32 %v885, %v902
    %v908 = vmul.f32 %v887, %v904
    %911 = vrot.lane.b32.xlu0 %v907, 32
    %v912 = vpop.permute.xlu0 %911
    %913 = vrot.lane.b32.xlu0 %v908, 32
    %v914 = vpop.permute.xlu0 %913
    %v917 = vadd.f32 %v897, %v912
    %v918 = vadd.f32 %v898, %v914
    %v919 = vtanh.pop %v917
    %v920 = vtanh.pop %v918
    %923 = vrot.lane.b32.xlu0 %v919, 32
    %v924 = vpop.permute.xlu0 %923
    %925 = vrot.lane.b32.xlu0 %v920, 32
    %v926 = vpop.permute.xlu0 %925
    %v929 = vmul.f32 %v885, %v924
    %v930 = vmul.f32 %v887, %v926
    %v933 = vrot.slane %v929, 4
    %v934 = vrot.slane %v930, 4
    %v935 = vsel %vm868, %v933, %v934
    %936 = vrot.lane.b32.xlu0 %v935, 64
    %v937 = vpop.permute.xlu0 %936
    %938 = vrot.lane.b32.xlu0 %v934, 64
    %v939 = vpop.permute.xlu0 %938
    %v940 = vsel %vm176, %v937, 0
    %v942 = vsel %vm176, %v939, 0
    %944 = vmatprep.subr.mxu0 0.0
    %945 = vmatpush1.msra.mxu0 0.0
    %946 = vmatprep.subr.mxu0 0.0
    %947 = vmatpush1.msra.mxu0 0.0
    %948 = vmatprep.subr.mxu0 0.0
    %949 = vmatpush1.msra.mxu0 0.0
    %950 = vmatprep.subr.mxu0 0.0
    %951 = vmatpush1.msra.mxu0 0.0
    %952 = vmatprep.subr.mxu0 0.0
    %953 = vmatpush1.msra.mxu0 0.0
    %954 = vmatprep.subr.mxu0 0.0
    %955 = vmatpush1.msra.mxu0 0.0
    %956 = vmatprep.subr.mxu0 0.0
    %957 = vmatpush1.msra.mxu0 0.0
    %958 = vmatprep.subr.mxu0 0.0
    %959 = vmatpush1.msra.mxu0 0.0
    %960 = vmatprep.subr.mxu0 0.0
    %961 = vmatpush1.msra.mxu0 0.0
    %962 = vmatprep.subr.mxu0 0.0
    %963 = vmatpush1.msra.mxu0 0.0
    %964 = vmatprep.subr.mxu0 0.0
    %965 = vmatpush1.msra.mxu0 0.0
    %966 = vmatprep.subr.mxu0 0.0
    %967 = vmatpush1.msra.mxu0 0.0
    %968 = vmatprep.subr.mxu0 0.0
    %969 = vmatpush1.msra.mxu0 %v156
    %970 = vmatprep.subr.mxu0 0.0
    %971 = vmatpush1.msra.mxu0 %v155
    %972 = vmatprep.subr.mxu0 0.0
    %973 = vmatpush1.msra.mxu0 %v154
    %974 = vmatprep.subr.mxu0 0.0
    %975 = vmatpush1.msra.mxu0 %v153
    %976 = vmatprep.subr.mxu0 0.0
    %977 = vmatpush2.msra.mxu0 0.0
    %978 = vmatprep.subr.mxu0 0.0
    %979 = vmatpush2.msra.mxu0 0.0
    %980 = vmatprep.subr.mxu0 0.0
    %981 = vmatpush2.msra.mxu0 0.0
    %982 = vmatprep.subr.mxu0 0.0
    %983 = vmatpush2.msra.mxu0 0.0
    %984 = vmatprep.subr.mxu0 0.0
    %985 = vmatpush2.msra.mxu0 0.0
    %986 = vmatprep.subr.mxu0 0.0
    %987 = vmatpush2.msra.mxu0 0.0
    %988 = vmatprep.subr.mxu0 0.0
    %989 = vmatpush2.msra.mxu0 0.0
    %990 = vmatprep.subr.mxu0 0.0
    %991 = vmatpush2.msra.mxu0 0.0
    %992 = vmatprep.subr.mxu0 0.0
    %993 = vmatpush2.msra.mxu0 0.0
    %994 = vmatprep.subr.mxu0 0.0
    %995 = vmatpush2.msra.mxu0 0.0
    %996 = vmatprep.subr.mxu0 0.0
    %997 = vmatpush2.msra.mxu0 0.0
    %998 = vmatprep.subr.mxu0 0.0
    %999 = vmatpush2.msra.mxu0 0.0
    %1000 = vmatprep.subr.mxu0 0.0
    %1001 = vmatpush2.msra.mxu0 0.0
    %1002 = vmatprep.subr.mxu0 0.0
    %1003 = vmatpush2.msra.mxu0 0.0
    %1004 = vmatprep.subr.mxu0 0.0
    %1005 = vmatpush2.msra.mxu0 0.0
    %1006 = vmatprep.subr.mxu0 0.0
    %1007 = vmatpush2.msra.mxu0 0.0
    %1008 = vmatprep.mubr.f32.mxu0 0.0
    %1009 = vmatmul.mubr.f32.gmra.mxu0 %v940
    %v1010 = vpop.f32.mrf.mxu0
    %v1011 = vadd.f32 0.0, %v1010
    %v1012 = vpop.f32.mrf.mxu0
    %1013 = vmatprep.mubr.f32.mxu0 0.0
    %1014 = vmatmul.mubr.f32.gmra.mxu0 %v942
    %v1015 = vpop.f32.mrf.mxu0
    %v1016 = vadd.f32 0.0, %v1015
    %v1017 = vpop.f32.mrf.mxu0
    %1018 = vdwg.mxu0
    %v1021 = vrot.slane %v1011, 2
    %v1022 = vrot.slane %v1016, 2
    %v1023 = vsel %vm477, %v1021, %v1022
    %v1026 = vadd.f32 %v499, %v1021
    %v1027 = vadd.f32 %v500, %v1023
    %v1028 = vxor.u32 %v1026, 2147483648
    %v1029 = vxor.u32 %v1027, 2147483648
    %v1030 = vmul.f32 %v1028, 1.442695
    %v1031 = vpow.pop %v1030
    %v1032 = vmul.f32 %v1029, 1.442695
    %v1033 = vpow.pop %v1032
    %v1034 = vadd.f32 %v1031, 1.0
    %v1035 = vadd.f32 %v1033, 1.0
    %v1036 = vrcp.pop %v1034
    %v1037 = vmul.f32 1.0, %v1036
    %v1038 = vrcp.pop %v1035
    %v1039 = vmul.f32 1.0, %v1038
    %v1040 = vtanh.pop %v1026
    %v1041 = vtanh.pop %v1027
    %v1044 = vrot.slane %v917, 6
    %v1045 = vrot.slane %v918, 6
    %v1046 = vsel %vm468, %v1044, %v1045
    %v1049 = vmul.f32 %v1037, %v1044
    %v1050 = vmul.f32 %v1039, %v1046
    %1053 = vrot.lane.b32.xlu0 %v1040, 32
    %v1054 = vpop.permute.xlu0 %1053
    %1055 = vrot.lane.b32.xlu0 %v1041, 32
    %v1056 = vpop.permute.xlu0 %1055
    %v1059 = vmul.f32 %v1037, %v1054
    %v1060 = vmul.f32 %v1039, %v1056
    %1063 = vrot.lane.b32.xlu0 %v1059, 32
    %v1064 = vpop.permute.xlu0 %1063
    %1065 = vrot.lane.b32.xlu0 %v1060, 32
    %v1066 = vpop.permute.xlu0 %1065
    %v1069 = vadd.f32 %v1049, %v1064
    %v1070 = vadd.f32 %v1050, %v1066
    %v1071 = vtanh.pop %v1069
    %v1072 = vtanh.pop %v1070
    %1075 = vrot.lane.b32.xlu0 %v1071, 32
    %v1076 = vpop.permute.xlu0 %1075
    %1077 = vrot.lane.b32.xlu0 %v1072, 32
    %v1078 = vpop.permute.xlu0 %1077
    %v1081 = vmul.f32 %v1037, %v1076
    %v1082 = vmul.f32 %v1039, %v1078
    %v1087 = vrot.slane %v1081, 6
    %v1088 = vrot.slane %v1082, 6
    %v1089 = vsel %vm468, %v1087, %v1088
    %1090 = vrot.lane.b32.xlu0 %v1089, 64
    %v1091 = vpop.permute.xlu0 %1090
    %1092 = vrot.lane.b32.xlu0 %v1088, 64
    %v1093 = vpop.permute.xlu0 %1092
    %vm1096 = vcmask 130048
    %v1097 = vsel %vm1096, %v632, %v1091
    %v1098 = vsel %vm1096, %v634, %v1093
    %1099 = vrot.lane.b32.xlu0 %v776, 64
    %v1100 = vpop.permute.xlu0 %1099
    %1101 = vrot.lane.b32.xlu0 %v777, 64
    %v1102 = vpop.permute.xlu0 %1101
    %v1105 = vrot.slane %v929, 2
    %v1106 = vrot.slane %v930, 2
    %v1107 = vsel %vm477, %v1105, %v1106
    %1108 = vrot.lane.b32.xlu0 %v1107, 64
    %v1109 = vpop.permute.xlu0 %1108
    %1110 = vrot.lane.b32.xlu0 %v1106, 64
    %v1111 = vpop.permute.xlu0 %1110
    %v1114 = vsel %vm1096, %v1100, %v1109
    %v1115 = vsel %vm1096, %v1102, %v1111
    %1116 = vrot.lane.b32.xlu0 %v929, 64
    %v1117 = vpop.permute.xlu0 %1116
    %1118 = vrot.lane.b32.xlu0 %v930, 64
    %v1119 = vpop.permute.xlu0 %1118
    %v1122 = vrot.slane %v776, 6
    %v1123 = vrot.slane %v777, 6
    %v1124 = vsel %vm468, %v1122, %v1123
    %1125 = vrot.lane.b32.xlu0 %v1122, 64
    %v1126 = vpop.permute.xlu0 %1125
    %1127 = vrot.lane.b32.xlu0 %v1124, 64
    %v1128 = vpop.permute.xlu0 %1127
    %v1131 = vsel %vm1096, %v1117, %v1126
    %v1132 = vsel %vm1096, %v1119, %v1128
    %1133 = vrot.lane.b32.xlu0 %v1081, 64
    %v1134 = vpop.permute.xlu0 %1133
    %1135 = vrot.lane.b32.xlu0 %v1082, 64
    %v1136 = vpop.permute.xlu0 %1135
    %v1139 = vrot.slane %v627, 2
    %v1140 = vrot.slane %v628, 2
    %v1141 = vsel %vm477, %v1139, %v1140
    %1142 = vrot.lane.b32.xlu0 %v1139, 64
    %v1143 = vpop.permute.xlu0 %1142
    %1144 = vrot.lane.b32.xlu0 %v1141, 64
    %v1145 = vpop.permute.xlu0 %1144
    %v1148 = vsel %vm1096, %v1134, %v1143
    %v1149 = vsel %vm1096, %v1136, %v1145
    %v1150 = vsel %vm468, %v1098, %v1114
    %v1151 = vsel %vm868, %v1115, %v1131
    %v1152 = vsel %vm477, %v1132, %v1148
    %v1154 = vsel %vm176, %v1097, 0
    %v1157 = vsel %vm176, %v1150, 0
    %v1160 = vsel %vm176, %v1151, 0
    %v1163 = vsel %vm176, %v1152, 0
    %v1166 = vsel %vm176, %v1149, 0
    %1168 = vmatprep.subr.mxu0 0.0
    %1169 = vmatpush1.msra.mxu0 0.0
    %1170 = vmatprep.subr.mxu0 0.0
    %1171 = vmatpush1.msra.mxu0 0.0
    %1172 = vmatprep.subr.mxu0 0.0
    %1173 = vmatpush1.msra.mxu0 0.0
    %1174 = vmatprep.subr.mxu0 0.0
    %1175 = vmatpush1.msra.mxu0 0.0
    %1176 = vmatprep.subr.mxu0 0.0
    %1177 = vmatpush1.msra.mxu0 0.0
    %1178 = vmatprep.subr.mxu0 0.0
    %1179 = vmatpush1.msra.mxu0 0.0
    %1180 = vmatprep.subr.mxu0 0.0
    %1181 = vmatpush1.msra.mxu0 0.0
    %1182 = vmatprep.subr.mxu0 0.0
    %1183 = vmatpush1.msra.mxu0 0.0
    %1184 = vmatprep.subr.mxu0 0.0
    %1185 = vmatpush1.msra.mxu0 0.0
    %1186 = vmatprep.subr.mxu0 0.0
    %1187 = vmatpush1.msra.mxu0 0.0
    %1188 = vmatprep.subr.mxu0 0.0
    %1189 = vmatpush1.msra.mxu0 0.0
    %1190 = vmatprep.subr.mxu0 0.0
    %1191 = vmatpush1.msra.mxu0 0.0
    %1192 = vmatprep.subr.mxu0 0.0
    %1193 = vmatpush1.msra.mxu0 %v160
    %1194 = vmatprep.subr.mxu0 0.0
    %1195 = vmatpush1.msra.mxu0 %v159
    %1196 = vmatprep.subr.mxu0 0.0
    %1197 = vmatpush1.msra.mxu0 %v158
    %1198 = vmatprep.subr.mxu0 0.0
    %1199 = vmatpush1.msra.mxu0 %v157
    %1200 = vmatprep.subr.mxu0 0.0
    %1201 = vmatpush2.msra.mxu0 0.0
    %1202 = vmatprep.subr.mxu0 0.0
    %1203 = vmatpush2.msra.mxu0 0.0
    %1204 = vmatprep.subr.mxu0 0.0
    %1205 = vmatpush2.msra.mxu0 0.0
    %1206 = vmatprep.subr.mxu0 0.0
    %1207 = vmatpush2.msra.mxu0 0.0
    %1208 = vmatprep.subr.mxu0 0.0
    %1209 = vmatpush2.msra.mxu0 0.0
    %1210 = vmatprep.subr.mxu0 0.0
    %1211 = vmatpush2.msra.mxu0 0.0
    %1212 = vmatprep.subr.mxu0 0.0
    %1213 = vmatpush2.msra.mxu0 0.0
    %1214 = vmatprep.subr.mxu0 0.0
    %1215 = vmatpush2.msra.mxu0 0.0
    %1216 = vmatprep.subr.mxu0 0.0
    %1217 = vmatpush2.msra.mxu0 0.0
    %1218 = vmatprep.subr.mxu0 0.0
    %1219 = vmatpush2.msra.mxu0 0.0
    %1220 = vmatprep.subr.mxu0 0.0
    %1221 = vmatpush2.msra.mxu0 0.0
    %1222 = vmatprep.subr.mxu0 0.0
    %1223 = vmatpush2.msra.mxu0 0.0
    %1224 = vmatprep.subr.mxu0 0.0
    %1225 = vmatpush2.msra.mxu0 0.0
    %1226 = vmatprep.subr.mxu0 0.0
    %1227 = vmatpush2.msra.mxu0 0.0
    %1228 = vmatprep.subr.mxu0 0.0
    %1229 = vmatpush2.msra.mxu0 0.0
    %1230 = vmatprep.subr.mxu0 0.0
    %1231 = vmatpush2.msra.mxu0 0.0
    %1232 = vmatprep.mubr.f32.mxu0 0.0
    %1233 = vmatmul.mubr.f32.gmra.mxu0 %v1154
    %v1234 = vpop.f32.mrf.mxu0
    %v1235 = vadd.f32 0.0, %v1234
    %v1236 = vpop.f32.mrf.mxu0
    %1237 = vmatprep.mubr.f32.mxu0 0.0
    %1238 = vmatmul.mubr.f32.gmra.mxu0 %v1157
    %v1239 = vpop.f32.mrf.mxu0
    %v1240 = vadd.f32 0.0, %v1239
    %v1241 = vpop.f32.mrf.mxu0
    %1242 = vmatprep.mubr.f32.mxu0 0.0
    %1243 = vmatmul.mubr.f32.gmra.mxu0 %v1160
    %v1244 = vpop.f32.mrf.mxu0
    %v1245 = vadd.f32 0.0, %v1244
    %v1246 = vpop.f32.mrf.mxu0
    %1247 = vmatprep.mubr.f32.mxu0 0.0
    %1248 = vmatmul.mubr.f32.gmra.mxu0 %v1163
    %v1249 = vpop.f32.mrf.mxu0
    %v1250 = vadd.f32 0.0, %v1249
    %v1251 = vpop.f32.mrf.mxu0
    %1252 = vmatprep.mubr.f32.mxu0 0.0
    %1253 = vmatmul.mubr.f32.gmra.mxu0 %v1166
    %v1254 = vpop.f32.mrf.mxu0
    %v1255 = vadd.f32 0.0, %v1254
    %v1256 = vpop.f32.mrf.mxu0
    %1257 = vdwg.mxu0
    %v1258 = vadd.f32 %v443, %v1235
    %v1259 = vadd.f32 %v448, %v1240
    %v1260 = vadd.f32 %v453, %v1245
    %v1261 = vadd.f32 %v458, %v1250
    %v1262 = vadd.f32 %v463, %v1255
    %1263 = vmatprep.subr.mxu0 0.0
    %1264 = vmatpush1.msra.mxu0 0.0
    %1265 = vmatprep.subr.mxu0 0.0
    %1266 = vmatpush1.msra.mxu0 0.0
    %1267 = vmatprep.subr.mxu0 0.0
    %1268 = vmatpush1.msra.mxu0 0.0
    %1269 = vmatprep.subr.mxu0 0.0
    %1270 = vmatpush1.msra.mxu0 0.0
    %1271 = vmatprep.subr.mxu0 0.0
    %1272 = vmatpush1.msra.mxu0 0.0
    %1273 = vmatprep.subr.mxu0 0.0
    %1274 = vmatpush1.msra.mxu0 0.0
    %1275 = vmatprep.subr.mxu0 0.0
    %1276 = vmatpush1.msra.mxu0 0.0
    %1277 = vmatprep.subr.mxu0 0.0
    %1278 = vmatpush1.msra.mxu0 0.0
    %1279 = vmatprep.subr.mxu0 0.0
    %1280 = vmatpush1.msra.mxu0 0.0
    %1281 = vmatprep.subr.mxu0 0.0
    %1282 = vmatpush1.msra.mxu0 0.0
    %1283 = vmatprep.subr.mxu0 0.0
    %1284 = vmatpush1.msra.mxu0 0.0
    %1285 = vmatprep.subr.mxu0 0.0
    %1286 = vmatpush1.msra.mxu0 0.0
    %1287 = vmatprep.subr.mxu0 0.0
    %1288 = vmatpush1.msra.mxu0 %v164
    %1289 = vmatprep.subr.mxu0 0.0
    %1290 = vmatpush1.msra.mxu0 %v163
    %1291 = vmatprep.subr.mxu0 0.0
    %1292 = vmatpush1.msra.mxu0 %v162
    %1293 = vmatprep.subr.mxu0 0.0
    %1294 = vmatpush1.msra.mxu0 %v161
    %1295 = vmatprep.subr.mxu0 0.0
    %1296 = vmatpush2.msra.mxu0 0.0
    %1297 = vmatprep.subr.mxu0 0.0
    %1298 = vmatpush2.msra.mxu0 0.0
    %1299 = vmatprep.subr.mxu0 0.0
    %1300 = vmatpush2.msra.mxu0 0.0
    %1301 = vmatprep.subr.mxu0 0.0
    %1302 = vmatpush2.msra.mxu0 0.0
    %1303 = vmatprep.subr.mxu0 0.0
    %1304 = vmatpush2.msra.mxu0 0.0
    %1305 = vmatprep.subr.mxu0 0.0
    %1306 = vmatpush2.msra.mxu0 0.0
    %1307 = vmatprep.subr.mxu0 0.0
    %1308 = vmatpush2.msra.mxu0 0.0
    %1309 = vmatprep.subr.mxu0 0.0
    %1310 = vmatpush2.msra.mxu0 0.0
    %1311 = vmatprep.subr.mxu0 0.0
    %1312 = vmatpush2.msra.mxu0 0.0
    %1313 = vmatprep.subr.mxu0 0.0
    %1314 = vmatpush2.msra.mxu0 0.0
    %1315 = vmatprep.subr.mxu0 0.0
    %1316 = vmatpush2.msra.mxu0 0.0
    %1317 = vmatprep.subr.mxu0 0.0
    %1318 = vmatpush2.msra.mxu0 0.0
    %1319 = vmatprep.subr.mxu0 0.0
    %1320 = vmatpush2.msra.mxu0 0.0
    %1321 = vmatprep.subr.mxu0 0.0
    %1322 = vmatpush2.msra.mxu0 0.0
    %1323 = vmatprep.subr.mxu0 0.0
    %1324 = vmatpush2.msra.mxu0 0.0
    %1325 = vmatprep.subr.mxu0 0.0
    %1326 = vmatpush2.msra.mxu0 0.0
    %1327 = vmatprep.mubr.f32.mxu0 0.0
    %1328 = vmatmul.mubr.f32.gmra.mxu0 %v502
    %v1329 = vpop.f32.mrf.mxu0
    %v1330 = vadd.f32 0.0, %v1329
    %v1331 = vpop.f32.mrf.mxu0
    %1332 = vmatprep.mubr.f32.mxu0 0.0
    %1333 = vmatmul.mubr.f32.gmra.mxu0 %v502
    %v1334 = vpop.f32.mrf.mxu0
    %v1335 = vadd.f32 0.0, %v1334
    %v1336 = vpop.f32.mrf.mxu0
    %1337 = vdwg.mxu0
    %v1338 = vadd.f32 %v1258, %v1330
    %v1339 = vadd.f32 %v1259, %v1335
    %v1340 = vxor.u32 %v1338, 2147483648
    %v1341 = vxor.u32 %v1339, 2147483648
    %v1342 = vmul.f32 %v1340, 1.442695
    %v1343 = vpow.pop %v1342
    %v1344 = vmul.f32 %v1341, 1.442695
    %v1345 = vpow.pop %v1344
    %v1346 = vadd.f32 %v1343, 1.0
    %v1347 = vadd.f32 %v1345, 1.0
    %v1348 = vrcp.pop %v1346
    %v1349 = vmul.f32 1.0, %v1348
    %v1350 = vrcp.pop %v1347
    %v1351 = vmul.f32 1.0, %v1350
    %v1352 = vtanh.pop %v1338
    %v1353 = vtanh.pop %v1339
    %v1354 = vmul.f32 %v1349, 0.0
    %v1355 = vmul.f32 %v1351, 0.0
    %1358 = vrot.lane.b32.xlu0 %v1352, 32
    %v1359 = vpop.permute.xlu0 %1358
    %1360 = vrot.lane.b32.xlu0 %v1353, 32
    %v1361 = vpop.permute.xlu0 %1360
    %v1364 = vmul.f32 %v1349, %v1359
    %v1365 = vmul.f32 %v1351, %v1361
    %1368 = vrot.lane.b32.xlu0 %v1364, 32
    %v1369 = vpop.permute.xlu0 %1368
    %1370 = vrot.lane.b32.xlu0 %v1365, 32
    %v1371 = vpop.permute.xlu0 %1370
    %v1374 = vadd.f32 %v1354, %v1369
    %v1375 = vadd.f32 %v1355, %v1371
    %v1376 = vtanh.pop %v1374
    %v1377 = vtanh.pop %v1375
    %1380 = vrot.lane.b32.xlu0 %v1376, 32
    %v1381 = vpop.permute.xlu0 %1380
    %1382 = vrot.lane.b32.xlu0 %v1377, 32
    %v1383 = vpop.permute.xlu0 %1382
    %v1386 = vmul.f32 %v1349, %v1381
    %v1387 = vmul.f32 %v1351, %v1383
    %vm1388 = vcmask 785920
    %v1389 = vsel %vm1388, %v1386, -inf
    %vm1390 = vcmask 779776
    %v1391 = vsel %vm1390, %v1387, -inf
    %v1392 = vmax.f32 %v1389, %v1391
    %v1393 = vrot.slane %v1392, 4
    %v1394 = vmax.f32 %v1392, %v1393
    %v1395 = vrot.slane %v1394, 2
    %v1396 = vmax.f32 %v1394, %v1395
    %v1397 = vrot.slane %v1396, 1
    %v1398 = vmax.f32 %v1396, %v1397
    %1401 = vrot.lane.b32.xlu0 %v1386, 64
    %v1402 = vpop.permute.xlu0 %1401
    %1403 = vrot.lane.b32.xlu0 %v1387, 64
    %v1404 = vpop.permute.xlu0 %1403
    %v1405 = vsel %vm176, %v1402, 0
    %v1407 = vsel %vm176, %v1404, 0
    %1409 = vmatprep.subr.mxu0 0.0
    %1410 = vmatpush1.msra.mxu0 0.0
    %1411 = vmatprep.subr.mxu0 0.0
    %1412 = vmatpush1.msra.mxu0 0.0
    %1413 = vmatprep.subr.mxu0 0.0
    %1414 = vmatpush1.msra.mxu0 0.0
    %1415 = vmatprep.subr.mxu0 0.0
    %1416 = vmatpush1.msra.mxu0 0.0
    %1417 = vmatprep.subr.mxu0 0.0
    %1418 = vmatpush1.msra.mxu0 0.0
    %1419 = vmatprep.subr.mxu0 0.0
    %1420 = vmatpush1.msra.mxu0 0.0
    %1421 = vmatprep.subr.mxu0 0.0
    %1422 = vmatpush1.msra.mxu0 0.0
    %1423 = vmatprep.subr.mxu0 0.0
    %1424 = vmatpush1.msra.mxu0 0.0
    %1425 = vmatprep.subr.mxu0 0.0
    %1426 = vmatpush1.msra.mxu0 0.0
    %1427 = vmatprep.subr.mxu0 0.0
    %1428 = vmatpush1.msra.mxu0 0.0
    %1429 = vmatprep.subr.mxu0 0.0
    %1430 = vmatpush1.msra.mxu0 0.0
    %1431 = vmatprep.subr.mxu0 0.0
    %1432 = vmatpush1.msra.mxu0 0.0
    %1433 = vmatprep.subr.mxu0 0.0
    %1434 = vmatpush1.msra.mxu0 %v164
    %1435 = vmatprep.subr.mxu0 0.0
    %1436 = vmatpush1.msra.mxu0 %v163
    %1437 = vmatprep.subr.mxu0 0.0
    %1438 = vmatpush1.msra.mxu0 %v162
    %1439 = vmatprep.subr.mxu0 0.0
    %1440 = vmatpush1.msra.mxu0 %v161
    %1441 = vmatprep.subr.mxu0 0.0
    %1442 = vmatpush2.msra.mxu0 0.0
    %1443 = vmatprep.subr.mxu0 0.0
    %1444 = vmatpush2.msra.mxu0 0.0
    %1445 = vmatprep.subr.mxu0 0.0
    %1446 = vmatpush2.msra.mxu0 0.0
    %1447 = vmatprep.subr.mxu0 0.0
    %1448 = vmatpush2.msra.mxu0 0.0
    %1449 = vmatprep.subr.mxu0 0.0
    %1450 = vmatpush2.msra.mxu0 0.0
    %1451 = vmatprep.subr.mxu0 0.0
    %1452 = vmatpush2.msra.mxu0 0.0
    %1453 = vmatprep.subr.mxu0 0.0
    %1454 = vmatpush2.msra.mxu0 0.0
    %1455 = vmatprep.subr.mxu0 0.0
    %1456 = vmatpush2.msra.mxu0 0.0
    %1457 = vmatprep.subr.mxu0 0.0
    %1458 = vmatpush2.msra.mxu0 0.0
    %1459 = vmatprep.subr.mxu0 0.0
    %1460 = vmatpush2.msra.mxu0 0.0
    %1461 = vmatprep.subr.mxu0 0.0
    %1462 = vmatpush2.msra.mxu0 0.0
    %1463 = vmatprep.subr.mxu0 0.0
    %1464 = vmatpush2.msra.mxu0 0.0
    %1465 = vmatprep.subr.mxu0 0.0
    %1466 = vmatpush2.msra.mxu0 0.0
    %1467 = vmatprep.subr.mxu0 0.0
    %1468 = vmatpush2.msra.mxu0 0.0
    %1469 = vmatprep.subr.mxu0 0.0
    %1470 = vmatpush2.msra.mxu0 0.0
    %1471 = vmatprep.subr.mxu0 0.0
    %1472 = vmatpush2.msra.mxu0 0.0
    %1473 = vmatprep.mubr.f32.mxu0 0.0
    %1474 = vmatmul.mubr.f32.gmra.mxu0 %v1405
    %v1475 = vpop.f32.mrf.mxu0
    %v1476 = vadd.f32 0.0, %v1475
    %v1477 = vpop.f32.mrf.mxu0
    %1478 = vmatprep.mubr.f32.mxu0 0.0
    %1479 = vmatmul.mubr.f32.gmra.mxu0 %v1407
    %v1480 = vpop.f32.mrf.mxu0
    %v1481 = vadd.f32 0.0, %v1480
    %v1482 = vpop.f32.mrf.mxu0
    %1483 = vdwg.mxu0
    %v1486 = vrot.slane %v1476, 6
    %v1487 = vrot.slane %v1481, 6
    %v1488 = vsel %vm468, %v1486, %v1487
    %v1491 = vadd.f32 %v1259, %v1486
    %v1492 = vadd.f32 %v1260, %v1488
    %v1493 = vxor.u32 %v1491, 2147483648
    %v1494 = vxor.u32 %v1492, 2147483648
    %v1495 = vmul.f32 %v1493, 1.442695
    %v1496 = vpow.pop %v1495
    %v1497 = vmul.f32 %v1494, 1.442695
    %v1498 = vpow.pop %v1497
    %v1499 = vadd.f32 %v1496, 1.0
    %v1500 = vadd.f32 %v1498, 1.0
    %v1501 = vrcp.pop %v1499
    %v1502 = vmul.f32 1.0, %v1501
    %v1503 = vrcp.pop %v1500
    %v1504 = vmul.f32 1.0, %v1503
    %v1505 = vtanh.pop %v1491
    %v1506 = vtanh.pop %v1492
    %v1509 = vrot.slane %v1374, 6
    %v1510 = vrot.slane %v1375, 6
    %v1511 = vsel %vm468, %v1509, %v1510
    %v1514 = vmul.f32 %v1502, %v1509
    %v1515 = vmul.f32 %v1504, %v1511
    %1518 = vrot.lane.b32.xlu0 %v1505, 32
    %v1519 = vpop.permute.xlu0 %1518
    %1520 = vrot.lane.b32.xlu0 %v1506, 32
    %v1521 = vpop.permute.xlu0 %1520
    %v1524 = vmul.f32 %v1502, %v1519
    %v1525 = vmul.f32 %v1504, %v1521
    %1528 = vrot.lane.b32.xlu0 %v1524, 32
    %v1529 = vpop.permute.xlu0 %1528
    %1530 = vrot.lane.b32.xlu0 %v1525, 32
    %v1531 = vpop.permute.xlu0 %1530
    %v1534 = vadd.f32 %v1514, %v1529
    %v1535 = vadd.f32 %v1515, %v1531
    %v1536 = vtanh.pop %v1534
    %v1537 = vtanh.pop %v1535
    %1540 = vrot.lane.b32.xlu0 %v1536, 32
    %v1541 = vpop.permute.xlu0 %1540
    %1542 = vrot.lane.b32.xlu0 %v1537, 32
    %v1543 = vpop.permute.xlu0 %1542
    %v1546 = vmul.f32 %v1502, %v1541
    %v1547 = vmul.f32 %v1504, %v1543
    %vm1548 = vcmask 785922
    %v1549 = vsel %vm1548, %v1546, -inf
    %vm1550 = vcmask 781824
    %v1551 = vsel %vm1550, %v1547, -inf
    %v1552 = vmax.f32 %v1549, %v1551
    %v1553 = vrot.slane %v1552, 4
    %v1554 = vmax.f32 %v1552, %v1553
    %v1555 = vrot.slane %v1554, 2
    %v1556 = vmax.f32 %v1554, %v1555
    %v1557 = vrot.slane %v1556, 1
    %v1558 = vmax.f32 %v1556, %v1557
    %v1561 = vrot.slane %v1546, 2
    %v1562 = vrot.slane %v1547, 2
    %v1563 = vsel %vm477, %v1561, %v1562
    %1564 = vrot.lane.b32.xlu0 %v1563, 64
    %v1565 = vpop.permute.xlu0 %1564
    %1566 = vrot.lane.b32.xlu0 %v1562, 64
    %v1567 = vpop.permute.xlu0 %1566
    %v1568 = vsel %vm176, %v1565, 0
    %v1570 = vsel %vm176, %v1567, 0
    %1572 = vmatprep.subr.mxu0 0.0
    %1573 = vmatpush1.msra.mxu0 0.0
    %1574 = vmatprep.subr.mxu0 0.0
    %1575 = vmatpush1.msra.mxu0 0.0
    %1576 = vmatprep.subr.mxu0 0.0
    %1577 = vmatpush1.msra.mxu0 0.0
    %1578 = vmatprep.subr.mxu0 0.0
    %1579 = vmatpush1.msra.mxu0 0.0
    %1580 = vmatprep.subr.mxu0 0.0
    %1581 = vmatpush1.msra.mxu0 0.0
    %1582 = vmatprep.subr.mxu0 0.0
    %1583 = vmatpush1.msra.mxu0 0.0
    %1584 = vmatprep.subr.mxu0 0.0
    %1585 = vmatpush1.msra.mxu0 0.0
    %1586 = vmatprep.subr.mxu0 0.0
    %1587 = vmatpush1.msra.mxu0 0.0
    %1588 = vmatprep.subr.mxu0 0.0
    %1589 = vmatpush1.msra.mxu0 0.0
    %1590 = vmatprep.subr.mxu0 0.0
    %1591 = vmatpush1.msra.mxu0 0.0
    %1592 = vmatprep.subr.mxu0 0.0
    %1593 = vmatpush1.msra.mxu0 0.0
    %1594 = vmatprep.subr.mxu0 0.0
    %1595 = vmatpush1.msra.mxu0 0.0
    %1596 = vmatprep.subr.mxu0 0.0
    %1597 = vmatpush1.msra.mxu0 %v164
    %1598 = vmatprep.subr.mxu0 0.0
    %1599 = vmatpush1.msra.mxu0 %v163
    %1600 = vmatprep.subr.mxu0 0.0
    %1601 = vmatpush1.msra.mxu0 %v162
    %1602 = vmatprep.subr.mxu0 0.0
    %1603 = vmatpush1.msra.mxu0 %v161
    %1604 = vmatprep.subr.mxu0 0.0
    %1605 = vmatpush2.msra.mxu0 0.0
    %1606 = vmatprep.subr.mxu0 0.0
    %1607 = vmatpush2.msra.mxu0 0.0
    %1608 = vmatprep.subr.mxu0 0.0
    %1609 = vmatpush2.msra.mxu0 0.0
    %1610 = vmatprep.subr.mxu0 0.0
    %1611 = vmatpush2.msra.mxu0 0.0
    %1612 = vmatprep.subr.mxu0 0.0
    %1613 = vmatpush2.msra.mxu0 0.0
    %1614 = vmatprep.subr.mxu0 0.0
    %1615 = vmatpush2.msra.mxu0 0.0
    %1616 = vmatprep.subr.mxu0 0.0
    %1617 = vmatpush2.msra.mxu0 0.0
    %1618 = vmatprep.subr.mxu0 0.0
    %1619 = vmatpush2.msra.mxu0 0.0
    %1620 = vmatprep.subr.mxu0 0.0
    %1621 = vmatpush2.msra.mxu0 0.0
    %1622 = vmatprep.subr.mxu0 0.0
    %1623 = vmatpush2.msra.mxu0 0.0
    %1624 = vmatprep.subr.mxu0 0.0
    %1625 = vmatpush2.msra.mxu0 0.0
    %1626 = vmatprep.subr.mxu0 0.0
    %1627 = vmatpush2.msra.mxu0 0.0
    %1628 = vmatprep.subr.mxu0 0.0
    %1629 = vmatpush2.msra.mxu0 0.0
    %1630 = vmatprep.subr.mxu0 0.0
    %1631 = vmatpush2.msra.mxu0 0.0
    %1632 = vmatprep.subr.mxu0 0.0
    %1633 = vmatpush2.msra.mxu0 0.0
    %1634 = vmatprep.subr.mxu0 0.0
    %1635 = vmatpush2.msra.mxu0 0.0
    %1636 = vmatprep.mubr.f32.mxu0 0.0
    %1637 = vmatmul.mubr.f32.gmra.mxu0 %v1568
    %v1638 = vpop.f32.mrf.mxu0
    %v1639 = vadd.f32 0.0, %v1638
    %v1640 = vpop.f32.mrf.mxu0
    %1641 = vmatprep.mubr.f32.mxu0 0.0
    %1642 = vmatmul.mubr.f32.gmra.mxu0 %v1570
    %v1643 = vpop.f32.mrf.mxu0
    %v1644 = vadd.f32 0.0, %v1643
    %v1645 = vpop.f32.mrf.mxu0
    %1646 = vdwg.mxu0
    %v1649 = vrot.slane %v1639, 4
    %v1650 = vrot.slane %v1644, 4
    %v1651 = vsel %vm868, %v1649, %v1650
    %v1654 = vadd.f32 %v1260, %v1649
    %v1655 = vadd.f32 %v1261, %v1651
    %v1656 = vxor.u32 %v1654, 2147483648
    %v1657 = vxor.u32 %v1655, 2147483648
    %v1658 = vmul.f32 %v1656, 1.442695
    %v1659 = vpow.pop %v1658
    %v1660 = vmul.f32 %v1657, 1.442695
    %v1661 = vpow.pop %v1660
    %v1662 = vadd.f32 %v1659, 1.0
    %v1663 = vadd.f32 %v1661, 1.0
    %v1664 = vrcp.pop %v1662
    %v1665 = vmul.f32 1.0, %v1664
    %v1666 = vrcp.pop %v1663
    %v1667 = vmul.f32 1.0, %v1666
    %v1668 = vtanh.pop %v1654
    %v1669 = vtanh.pop %v1655
    %v1672 = vrot.slane %v1534, 6
    %v1673 = vrot.slane %v1535, 6
    %v1674 = vsel %vm468, %v1672, %v1673
    %v1677 = vmul.f32 %v1665, %v1672
    %v1678 = vmul.f32 %v1667, %v1674
    %1681 = vrot.lane.b32.xlu0 %v1668, 32
    %v1682 = vpop.permute.xlu0 %1681
    %1683 = vrot.lane.b32.xlu0 %v1669, 32
    %v1684 = vpop.permute.xlu0 %1683
    %v1687 = vmul.f32 %v1665, %v1682
    %v1688 = vmul.f32 %v1667, %v1684
    %1691 = vrot.lane.b32.xlu0 %v1687, 32
    %v1692 = vpop.permute.xlu0 %1691
    %1693 = vrot.lane.b32.xlu0 %v1688, 32
    %v1694 = vpop.permute.xlu0 %1693
    %v1697 = vadd.f32 %v1677, %v1692
    %v1698 = vadd.f32 %v1678, %v1694
    %v1699 = vtanh.pop %v1697
    %v1700 = vtanh.pop %v1698
    %1703 = vrot.lane.b32.xlu0 %v1699, 32
    %v1704 = vpop.permute.xlu0 %1703
    %1705 = vrot.lane.b32.xlu0 %v1700, 32
    %v1706 = vpop.permute.xlu0 %1705
    %v1709 = vmul.f32 %v1665, %v1704
    %v1710 = vmul.f32 %v1667, %v1706
    %vm1711 = vcmask 785924
    %v1712 = vsel %vm1711, %v1709, -inf
    %vm1713 = vcmask 783872
    %v1714 = vsel %vm1713, %v1710, -inf
    %v1715 = vmax.f32 %v1712, %v1714
    %v1716 = vrot.slane %v1715, 4
    %v1717 = vmax.f32 %v1715, %v1716
    %v1718 = vrot.slane %v1717, 2
    %v1719 = vmax.f32 %v1717, %v1718
    %v1720 = vrot.slane %v1719, 1
    %v1721 = vmax.f32 %v1719, %v1720
    %v1724 = vrot.slane %v1709, 4
    %v1725 = vrot.slane %v1710, 4
    %v1726 = vsel %vm868, %v1724, %v1725
    %1727 = vrot.lane.b32.xlu0 %v1726, 64
    %v1728 = vpop.permute.xlu0 %1727
    %1729 = vrot.lane.b32.xlu0 %v1725, 64
    %v1730 = vpop.permute.xlu0 %1729
    %v1731 = vsel %vm176, %v1728, 0
    %v1733 = vsel %vm176, %v1730, 0
    %1735 = vmatprep.subr.mxu0 0.0
    %1736 = vmatpush1.msra.mxu0 0.0
    %1737 = vmatprep.subr.mxu0 0.0
    %1738 = vmatpush1.msra.mxu0 0.0
    %1739 = vmatprep.subr.mxu0 0.0
    %1740 = vmatpush1.msra.mxu0 0.0
    %1741 = vmatprep.subr.mxu0 0.0
    %1742 = vmatpush1.msra.mxu0 0.0
    %1743 = vmatprep.subr.mxu0 0.0
    %1744 = vmatpush1.msra.mxu0 0.0
    %1745 = vmatprep.subr.mxu0 0.0
    %1746 = vmatpush1.msra.mxu0 0.0
    %1747 = vmatprep.subr.mxu0 0.0
    %1748 = vmatpush1.msra.mxu0 0.0
    %1749 = vmatprep.subr.mxu0 0.0
    %1750 = vmatpush1.msra.mxu0 0.0
    %1751 = vmatprep.subr.mxu0 0.0
    %1752 = vmatpush1.msra.mxu0 0.0
    %1753 = vmatprep.subr.mxu0 0.0
    %1754 = vmatpush1.msra.mxu0 0.0
    %1755 = vmatprep.subr.mxu0 0.0
    %1756 = vmatpush1.msra.mxu0 0.0
    %1757 = vmatprep.subr.mxu0 0.0
    %1758 = vmatpush1.msra.mxu0 0.0
    %1759 = vmatprep.subr.mxu0 0.0
    %1760 = vmatpush1.msra.mxu0 %v164
    %1761 = vmatprep.subr.mxu0 0.0
    %1762 = vmatpush1.msra.mxu0 %v163
    %1763 = vmatprep.subr.mxu0 0.0
    %1764 = vmatpush1.msra.mxu0 %v162
    %1765 = vmatprep.subr.mxu0 0.0
    %1766 = vmatpush1.msra.mxu0 %v161
    %1767 = vmatprep.subr.mxu0 0.0
    %1768 = vmatpush2.msra.mxu0 0.0
    %1769 = vmatprep.subr.mxu0 0.0
    %1770 = vmatpush2.msra.mxu0 0.0
    %1771 = vmatprep.subr.mxu0 0.0
    %1772 = vmatpush2.msra.mxu0 0.0
    %1773 = vmatprep.subr.mxu0 0.0
    %1774 = vmatpush2.msra.mxu0 0.0
    %1775 = vmatprep.subr.mxu0 0.0
    %1776 = vmatpush2.msra.mxu0 0.0
    %1777 = vmatprep.subr.mxu0 0.0
    %1778 = vmatpush2.msra.mxu0 0.0
    %1779 = vmatprep.subr.mxu0 0.0
    %1780 = vmatpush2.msra.mxu0 0.0
    %1781 = vmatprep.subr.mxu0 0.0
    %1782 = vmatpush2.msra.mxu0 0.0
    %1783 = vmatprep.subr.mxu0 0.0
    %1784 = vmatpush2.msra.mxu0 0.0
    %1785 = vmatprep.subr.mxu0 0.0
    %1786 = vmatpush2.msra.mxu0 0.0
    %1787 = vmatprep.subr.mxu0 0.0
    %1788 = vmatpush2.msra.mxu0 0.0
    %1789 = vmatprep.subr.mxu0 0.0
    %1790 = vmatpush2.msra.mxu0 0.0
    %1791 = vmatprep.subr.mxu0 0.0
    %1792 = vmatpush2.msra.mxu0 0.0
    %1793 = vmatprep.subr.mxu0 0.0
    %1794 = vmatpush2.msra.mxu0 0.0
    %1795 = vmatprep.subr.mxu0 0.0
    %1796 = vmatpush2.msra.mxu0 0.0
    %1797 = vmatprep.subr.mxu0 0.0
    %1798 = vmatpush2.msra.mxu0 0.0
    %1799 = vmatprep.mubr.f32.mxu0 0.0
    %1800 = vmatmul.mubr.f32.gmra.mxu0 %v1731
    %v1801 = vpop.f32.mrf.mxu0
    %v1802 = vadd.f32 0.0, %v1801
    %v1803 = vpop.f32.mrf.mxu0
    %1804 = vmatprep.mubr.f32.mxu0 0.0
    %1805 = vmatmul.mubr.f32.gmra.mxu0 %v1733
    %v1806 = vpop.f32.mrf.mxu0
    %v1807 = vadd.f32 0.0, %v1806
    %v1808 = vpop.f32.mrf.mxu0
    %1809 = vdwg.mxu0
    %v1812 = vrot.slane %v1802, 2
    %v1813 = vrot.slane %v1807, 2
    %v1814 = vsel %vm477, %v1812, %v1813
    %v1817 = vadd.f32 %v1261, %v1812
    %v1818 = vadd.f32 %v1262, %v1814
    %v1819 = vxor.u32 %v1817, 2147483648
    %v1820 = vxor.u32 %v1818, 2147483648
    %v1821 = vmul.f32 %v1819, 1.442695
    %v1822 = vpow.pop %v1821
    %v1823 = vmul.f32 %v1820, 1.442695
    %v1824 = vpow.pop %v1823
    %v1825 = vadd.f32 %v1822, 1.0
    %v1826 = vadd.f32 %v1824, 1.0
    %v1827 = vrcp.pop %v1825
    %v1828 = vmul.f32 1.0, %v1827
    %v1829 = vrcp.pop %v1826
    %v1830 = vmul.f32 1.0, %v1829
    %v1831 = vtanh.pop %v1817
    %v1832 = vtanh.pop %v1818
    %v1835 = vrot.slane %v1697, 6
    %v1836 = vrot.slane %v1698, 6
    %v1837 = vsel %vm468, %v1835, %v1836
    %v1840 = vmul.f32 %v1828, %v1835
    %v1841 = vmul.f32 %v1830, %v1837
    %1844 = vrot.lane.b32.xlu0 %v1831, 32
    %v1845 = vpop.permute.xlu0 %1844
    %1846 = vrot.lane.b32.xlu0 %v1832, 32
    %v1847 = vpop.permute.xlu0 %1846
    %v1850 = vmul.f32 %v1828, %v1845
    %v1851 = vmul.f32 %v1830, %v1847
    %1854 = vrot.lane.b32.xlu0 %v1850, 32
    %v1855 = vpop.permute.xlu0 %1854
    %1856 = vrot.lane.b32.xlu0 %v1851, 32
    %v1857 = vpop.permute.xlu0 %1856
    %v1860 = vadd.f32 %v1840, %v1855
    %v1861 = vadd.f32 %v1841, %v1857
    %v1862 = vtanh.pop %v1860
    %v1863 = vtanh.pop %v1861
    %1866 = vrot.lane.b32.xlu0 %v1862, 32
    %v1867 = vpop.permute.xlu0 %1866
    %1868 = vrot.lane.b32.xlu0 %v1863, 32
    %v1869 = vpop.permute.xlu0 %1868
    %v1872 = vmul.f32 %v1828, %v1867
    %v1873 = vmul.f32 %v1830, %v1869
    %vm1874 = vcmask 785926
    %v1875 = vsel %vm1874, %v1872, -inf
    %v1876 = vsel %vm1388, %v1873, -inf
    %v1877 = vmax.f32 %v1875, %v1876
    %v1878 = vrot.slane %v1877, 4
    %v1879 = vmax.f32 %v1877, %v1878
    %v1880 = vrot.slane %v1879, 2
    %v1881 = vmax.f32 %v1879, %v1880
    %v1882 = vrot.slane %v1881, 1
    %v1883 = vmax.f32 %v1881, %v1882
    %vm1884 = vcmask 1040384
    %v1885 = vsel %vm1884, %v1398, %v1558
    %v1886 = vsel %vm468, %v1885, %v1721
    %vm1887 = vcmask 1042432
    %v1888 = vsel %vm1887, %v1886, %v1883
    %v1889 = vlaneseq
    %v1890 = vshrl.u32 %v1889, 7
    %v1891 = vsub.s32 0, %v1890
    %v1892 = vrot.slane %v171, %v1891
    %1894 = vrot.lane.b32.xlu0 %v1888, 64
    %v1895 = vpop.permute.xlu0 %1894
    %v1896 = vsel %vm176, %v1895, 0
    %1898 = vmatprep.subr.mxu0 0.0
    %1899 = vmatpush1.msra.mxu0 0.0
    %1900 = vmatprep.subr.mxu0 0.0
    %1901 = vmatpush1.msra.mxu0 0.0
    %1902 = vmatprep.subr.mxu0 0.0
    %1903 = vmatpush1.msra.mxu0 0.0
    %1904 = vmatprep.subr.mxu0 0.0
    %1905 = vmatpush1.msra.mxu0 0.0
    %1906 = vmatprep.subr.mxu0 0.0
    %1907 = vmatpush1.msra.mxu0 0.0
    %1908 = vmatprep.subr.mxu0 0.0
    %1909 = vmatpush1.msra.mxu0 0.0
    %1910 = vmatprep.subr.mxu0 0.0
    %1911 = vmatpush1.msra.mxu0 0.0
    %1912 = vmatprep.subr.mxu0 0.0
    %1913 = vmatpush1.msra.mxu0 0.0
    %1914 = vmatprep.subr.mxu0 0.0
    %1915 = vmatpush1.msra.mxu0 0.0
    %1916 = vmatprep.subr.mxu0 0.0
    %1917 = vmatpush1.msra.mxu0 0.0
    %1918 = vmatprep.subr.mxu0 0.0
    %1919 = vmatpush1.msra.mxu0 0.0
    %1920 = vmatprep.subr.mxu0 0.0
    %1921 = vmatpush1.msra.mxu0 0.0
    %1922 = vmatprep.subr.mxu0 0.0
    %1923 = vmatpush1.msra.mxu0 %v168
    %1924 = vmatprep.subr.mxu0 0.0
    %1925 = vmatpush1.msra.mxu0 %v167
    %1926 = vmatprep.subr.mxu0 0.0
    %1927 = vmatpush1.msra.mxu0 %v166
    %1928 = vmatprep.subr.mxu0 0.0
    %1929 = vmatpush1.msra.mxu0 %v165
    %1930 = vmatprep.subr.mxu0 0.0
    %1931 = vmatpush2.msra.mxu0 0.0
    %1932 = vmatprep.subr.mxu0 0.0
    %1933 = vmatpush2.msra.mxu0 0.0
    %1934 = vmatprep.subr.mxu0 0.0
    %1935 = vmatpush2.msra.mxu0 0.0
    %1936 = vmatprep.subr.mxu0 0.0
    %1937 = vmatpush2.msra.mxu0 0.0
    %1938 = vmatprep.subr.mxu0 0.0
    %1939 = vmatpush2.msra.mxu0 0.0
    %1940 = vmatprep.subr.mxu0 0.0
    %1941 = vmatpush2.msra.mxu0 0.0
    %1942 = vmatprep.subr.mxu0 0.0
    %1943 = vmatpush2.msra.mxu0 0.0
    %1944 = vmatprep.subr.mxu0 0.0
    %1945 = vmatpush2.msra.mxu0 0.0
    %1946 = vmatprep.subr.mxu0 0.0
    %1947 = vmatpush2.msra.mxu0 0.0
    %1948 = vmatprep.subr.mxu0 0.0
    %1949 = vmatpush2.msra.mxu0 0.0
    %1950 = vmatprep.subr.mxu0 0.0
    %1951 = vmatpush2.msra.mxu0 0.0
    %1952 = vmatprep.subr.mxu0 0.0
    %1953 = vmatpush2.msra.mxu0 0.0
    %1954 = vmatprep.subr.mxu0 0.0
    %1955 = vmatpush2.msra.mxu0 0.0
    %1956 = vmatprep.subr.mxu0 0.0
    %1957 = vmatpush2.msra.mxu0 0.0
    %1958 = vmatprep.subr.mxu0 0.0
    %1959 = vmatpush2.msra.mxu0 0.0
    %1960 = vmatprep.subr.mxu0 0.0
    %1961 = vmatpush2.msra.mxu0 0.0
    %1962 = vmatprep.mubr.f32.mxu0 0.0
    %1963 = vmatmul.mubr.f32.gmra.mxu0 %v1896
    %v1964 = vpop.f32.mrf.mxu0
    %v1965 = vadd.f32 %v1892, %v1964
    %v1966 = vpop.f32.mrf.mxu0
    %1967 = vdwg.mxu0
    %1968 = vst [vmem:[#allocation2] sm:$0xf] %v1965
    // Predicated region
    $region18: #{forward.1} parent=1 // pred_check
      _
    $region19: #{forward.1} parent=1 // pred_check_branch
      %1970 = sbr.rel (0) target = $region21
    $region20: #{forward.1} parent=1 // pred_region
      %s1972 = ssub.s32 64, 64
      %1973 = vsyncadd [#allocation3], %s1972
      %s1975 = sshll.u32 [#allocation2], 4
      %s1976 = int_to_ptr.vmem [resolvable:$true] %s1975
      %1978 = dma.vmem_to_hbm [thread:$0]  %s1976, 64, %s4, [#allocation3]
    $region21: #{forward.1} parent=1 // pred_fallthru
      _
    // Predicated region
    $region22: #{forward.1} parent=1 // pred_check
      _
    $region23: #{forward.1} parent=1 // pred_check_branch
      %1980 = sbr.rel (0) target = $region25
    $region24: #{forward.1} parent=1 // pred_region
      %1981 = dma.done [#allocation3], 64
    $region25: #{forward.1} parent=1 // pred_fallthru
      _
    %1982 = vsyncpa [#allocation3], 1

</llo_original>
